<compile_context>
chip_gen: v7x
topology: tpu7x:2x2x1
jax: 0.10.0
libtpu: 0.0.40
codegen_flags: <defaults>
</compile_context>

<pallas_src>
import jax
import jax.numpy as jnp
from jax import lax
from jax.experimental import pallas as pl
from jax.experimental.pallas import tpu as pltpu

LN_EPS = 1e-5  # torch.nn.LayerNorm default


def _round_up(x, m):
    return (x + m - 1) // m * m


# ---------------------------------------------------------------------------
# Fused kernel: LayerNorm (affine pre-folded) -> Linear -> SiLU -> Linear -> +bias -> +residual
# ---------------------------------------------------------------------------
def _prenorm_ff_residual_kernel(x_ref, w1_ref, b1_ref, w2_ref, b2_ref, o_ref):
    # x_ref: (TM, D) rows;  w1_ref: (D, H) bf16;  b1_ref: (1, H) f32
    # w2_ref: (H, D) bf16;  b2_ref: (1, D) f32;   o_ref: (TM, D)
    x = x_ref[...].astype(jnp.float32)

    # LayerNorm (gamma/beta already folded into w1/b1 by the wrapper).
    mu = jnp.mean(x, axis=-1, keepdims=True)
    xc = x - mu
    var = jnp.mean(xc * xc, axis=-1, keepdims=True)
    y = xc * lax.rsqrt(var + LN_EPS)

    # Linear 1: bf16 MXU operands, f32 accumulation; bias add in f32.
    h = jnp.dot(y.astype(jnp.bfloat16), w1_ref[...],
                preferred_element_type=jnp.float32) + b1_ref[...]
    # SiLU: exp + approx reciprocal both run on the EUP slot (VALU stays free).
    h = h * pl.reciprocal(1.0 + jnp.exp(-h), approx=True)

    # Linear 2: bf16 operands, f32 accumulation; bias + fused residual, then store.
    out = jnp.dot(h.astype(jnp.bfloat16), w2_ref[...],
                  preferred_element_type=jnp.float32) + b2_ref[...]
    o_ref[...] = (out + x).astype(o_ref.dtype)


def prenorm_feedforward_residual(x, gamma, beta, w1, b1, w2, b2, *, tm=512):
    """PreNorm(FeedForward)(x) + x, fused.

    x: (..., D); LayerNorm over the last dim (torch semantics, eps=1e-5);
    FeedForward = Linear(D->H) -> SiLU -> Linear(H->D).
    """
    orig_shape = x.shape
    D = int(orig_shape[-1])
    H = int(w1.shape[1])
    M = 1
    for s in orig_shape[:-1]:
        M *= int(s)

    # Fold the LayerNorm affine into the first Linear (exact algebra), then cast
    # the weight matrices to bf16 for the MXU (halves resident VMEM + weight DMA).
    w1f = (gamma.astype(jnp.float32)[:, None]
           * w1.astype(jnp.float32)).astype(jnp.bfloat16)                       # (D, H) bf16
    b1f = (beta.astype(jnp.float32) @ w1.astype(jnp.float32)
           + b1.astype(jnp.float32)).reshape(1, H)                              # (1, H) f32
    w2b = w2.astype(jnp.bfloat16)                                               # (H, D) bf16
    b2r = b2.astype(jnp.float32).reshape(1, D)                                  # (1, D) f32

    # Flatten all leading dims into a row axis and tile it.
    x2 = x.reshape(M, D)
    tm = min(tm, _round_up(M, 8))
    m_pad = _round_up(M, tm)
    if m_pad != M:
        x2 = jnp.pad(x2, ((0, m_pad - M), (0, 0)))

    out = pl.pallas_call(
        _prenorm_ff_residual_kernel,
        out_shape=jax.ShapeDtypeStruct((m_pad, D), x.dtype),
        grid_spec=pltpu.PrefetchScalarGridSpec(
            num_scalar_prefetch=0,
            grid=(m_pad // tm,),
            in_specs=[
                pl.BlockSpec((tm, D), lambda i: (i, 0)),   # x row tile
                pl.BlockSpec((D, H), lambda i: (0, 0)),    # W1' (grid-invariant, resident)
                pl.BlockSpec((1, H), lambda i: (0, 0)),    # b1'
                pl.BlockSpec((H, D), lambda i: (0, 0)),    # W2
                pl.BlockSpec((1, D), lambda i: (0, 0)),    # b2
            ],
            out_specs=pl.BlockSpec((tm, D), lambda i: (i, 0)),
        ),
        compiler_params=pltpu.CompilerParams(
            dimension_semantics=("parallel",),
            vmem_limit_bytes=32 * 1024 * 1024,
        ),
    )(x2, w1f, b1f, w2b, b2r)

    if m_pad != M:
        out = out[:M]
    return out.reshape(orig_shape)


if __name__ == "__main__":
    key = jax.random.PRNGKey(0)

    # Shapes implied by MobileViT_V2's first MobileViTBlock:
    #   image 32x32, patch (2,2) -> p = 4 patches, n = 16*16 = 256 tokens,
    #   dim = dims[0] = 96, mlp_dim = 2*96 = 192.  Batch = 2.
    # => M = 2*4*256 = 2048 rows; TM = 512 -> 4 grid steps (>= 2 per core on v7x).
    B, P, N, D, H = 2, 4, 256, 96, 192

    ks = jax.random.split(key, 7)
    x = jax.random.normal(ks[0], (B, P, N, D), dtype=jnp.float32)

    # Non-trivial LayerNorm affine (exercises the gamma/beta folding).
    gamma = 1.0 + 0.1 * jax.random.normal(ks[1], (D,), dtype=jnp.float32)
    beta = 0.05 * jax.random.normal(ks[2], (D,), dtype=jnp.float32)

    # FeedForward parameters.
    w1 = jax.random.normal(ks[3], (D, H), dtype=jnp.float32) / jnp.sqrt(D)
    b1 = 0.02 * jax.random.normal(ks[4], (H,), dtype=jnp.float32)
    w2 = jax.random.normal(ks[5], (H, D), dtype=jnp.float32) / jnp.sqrt(H)
    b2 = 0.02 * jax.random.normal(ks[6], (D,), dtype=jnp.float32)

    out = prenorm_feedforward_residual(x, gamma, beta, w1, b1, w2, b2)
    jax.block_until_ready(out)

    # Plain-JAX reference (f32, HIGHEST): LayerNorm -> Linear -> SiLU -> Linear -> + x.
    mu = jnp.mean(x, axis=-1, keepdims=True)
    var = jnp.mean((x - mu) ** 2, axis=-1, keepdims=True)
    y_ref = (x - mu) / jnp.sqrt(var + LN_EPS) * gamma + beta
    h_ref = jnp.einsum("bpnd,dh->bpnh", y_ref, w1,
                       precision=lax.Precision.HIGHEST) + b1
    h_ref = h_ref * (1.0 / (1.0 + jnp.exp(-h_ref)))
    ref = jnp.einsum("bpnh,hd->bpnd", h_ref, w2,
                     precision=lax.Precision.HIGHEST) + b2 + x

    assert out.shape == ref.shape, (out.shape, ref.shape)
    # Kernel uses bf16 MXU operands (f32 accumulate) + approx reciprocal in SiLU,
    # so compare at bf16-matmul tolerance against the exact-f32 reference.
    max_err = jnp.max(jnp.abs(out - ref))
    assert jnp.allclose(out, ref, atol=2e-2, rtol=2e-2), f"mismatch: {max_err}"

    print("KERNEL_OK")
</pallas_src>

<mosaic_0001>
module attributes {stable_mosaic.version = 11 : i64} {
  func.func @_prenorm_ff_residual_kernel(%arg0: i32, %arg1: memref<512x96xf32, #tpu.memory_space<vmem>>, %arg2: memref<96x192xbf16, #tpu.memory_space<vmem>>, %arg3: memref<1x192xf32, #tpu.memory_space<vmem>>, %arg4: memref<192x96xbf16, #tpu.memory_space<vmem>>, %arg5: memref<1x96xf32, #tpu.memory_space<vmem>>, %arg6: memref<512x96xf32, #tpu.memory_space<vmem>>) attributes {dimension_semantics = [#tpu.dimension_semantics<parallel>], iteration_bounds = array<i64: 4>, scalar_prefetch = 0 : i64, scratch_operands = 0 : i64, tpu.core_type = #tpu.core_type<tc>, window_params = [{transform_indices = @transform_0, window_bounds = array<i64: 512, 96>}, {pipeline_mode = #tpu.pipeline_mode<synchronous>, transform_indices = @transform_1, window_bounds = array<i64: 96, 192>}, {pipeline_mode = #tpu.pipeline_mode<synchronous>, transform_indices = @transform_2, window_bounds = array<i64: 1, 192>}, {pipeline_mode = #tpu.pipeline_mode<synchronous>, transform_indices = @transform_3, window_bounds = array<i64: 192, 96>}, {pipeline_mode = #tpu.pipeline_mode<synchronous>, transform_indices = @transform_4, window_bounds = array<i64: 1, 96>}, {transform_indices = @transform_5, window_bounds = array<i64: 512, 96>}]} {
    %c0 = arith.constant 0 : index
    %c0_0 = arith.constant 0 : index
    %0 = vector.load %arg1[%c0, %c0_0] : memref<512x96xf32, #tpu.memory_space<vmem>>, vector<512x96xf32>
    %cst = arith.constant dense<0.000000e+00> : vector<512xf32>
    %1 = vector.multi_reduction <add>, %0, %cst [1] : vector<512x96xf32> to vector<512xf32>
    %2 = vector.shape_cast %1 : vector<512xf32> to vector<512x1xf32>
    %cst_1 = arith.constant 9.600000e+01 : f32
    %3 = vector.broadcast %cst_1 : f32 to vector<512x1xf32>
    %4 = arith.divf %2, %3 : vector<512x1xf32>
    %5 = vector.broadcast %4 : vector<512x1xf32> to vector<512x96xf32>
    %6 = arith.subf %0, %5 : vector<512x96xf32>
    %7 = arith.mulf %6, %6 : vector<512x96xf32>
    %cst_2 = arith.constant dense<0.000000e+00> : vector<512xf32>
    %8 = vector.multi_reduction <add>, %7, %cst_2 [1] : vector<512x96xf32> to vector<512xf32>
    %9 = vector.shape_cast %8 : vector<512xf32> to vector<512x1xf32>
    %cst_3 = arith.constant 9.600000e+01 : f32
    %10 = vector.broadcast %cst_3 : f32 to vector<512x1xf32>
    %11 = arith.divf %9, %10 : vector<512x1xf32>
    %cst_4 = arith.constant 9.99999974E-6 : f32
    %12 = vector.broadcast %cst_4 : f32 to vector<512x1xf32>
    %13 = arith.addf %11, %12 : vector<512x1xf32>
    %14 = math.rsqrt %13 : vector<512x1xf32>
    %15 = vector.broadcast %14 : vector<512x1xf32> to vector<512x96xf32>
    %16 = arith.mulf %6, %15 : vector<512x96xf32>
    %17 = arith.truncf %16 : vector<512x96xf32> to vector<512x96xbf16>
    %c0_5 = arith.constant 0 : index
    %c0_6 = arith.constant 0 : index
    %18 = vector.load %arg2[%c0_5, %c0_6] : memref<96x192xbf16, #tpu.memory_space<vmem>>, vector<96x192xbf16>
    %cst_7 = arith.constant dense<0.000000e+00> : vector<512x192xf32>
    %19 = tpu.matmul %17, %18, %cst_7 {dimension_numbers = #tpu.dot_dimension_numbers<[1], [0], [0], [1], [0, 0, 1, 1], [], []>} : vector<512x96xbf16>, vector<96x192xbf16>, vector<512x192xf32> -> vector<512x192xf32>
    %c0_8 = arith.constant 0 : index
    %c0_9 = arith.constant 0 : index
    %20 = vector.load %arg3[%c0_8, %c0_9] : memref<1x192xf32, #tpu.memory_space<vmem>>, vector<1x192xf32>
    %21 = vector.broadcast %20 : vector<1x192xf32> to vector<512x192xf32>
    %22 = arith.addf %19, %21 : vector<512x192xf32>
    %cst_10 = arith.constant 0.000000e+00 : f32
    %23 = vector.broadcast %cst_10 : f32 to vector<512x192xf32>
    %24 = arith.subf %23, %22 : vector<512x192xf32>
    %25 = math.exp %24 : vector<512x192xf32>
    %cst_11 = arith.constant 1.000000e+00 : f32
    %26 = vector.broadcast %cst_11 : f32 to vector<512x192xf32>
    %27 = arith.addf %26, %25 : vector<512x192xf32>
    %28 = tpu.reciprocal %27 {approx = true} : vector<512x192xf32> -> vector<512x192xf32>
    %29 = arith.mulf %22, %28 : vector<512x192xf32>
    %30 = arith.truncf %29 : vector<512x192xf32> to vector<512x192xbf16>
    %c0_12 = arith.constant 0 : index
    %c0_13 = arith.constant 0 : index
    %31 = vector.load %arg4[%c0_12, %c0_13] : memref<192x96xbf16, #tpu.memory_space<vmem>>, vector<192x96xbf16>
    %cst_14 = arith.constant dense<0.000000e+00> : vector<512x96xf32>
    %32 = tpu.matmul %30, %31, %cst_14 {dimension_numbers = #tpu.dot_dimension_numbers<[1], [0], [0], [1], [0, 0, 1, 1], [], []>} : vector<512x192xbf16>, vector<192x96xbf16>, vector<512x96xf32> -> vector<512x96xf32>
    %c0_15 = arith.constant 0 : index
    %c0_16 = arith.constant 0 : index
    %33 = vector.load %arg5[%c0_15, %c0_16] : memref<1x96xf32, #tpu.memory_space<vmem>>, vector<1x96xf32>
    %34 = vector.broadcast %33 : vector<1x96xf32> to vector<512x96xf32>
    %35 = arith.addf %32, %34 : vector<512x96xf32>
    %36 = arith.addf %35, %0 : vector<512x96xf32>
    %c0_17 = arith.constant 0 : index
    %c0_18 = arith.constant 0 : index
    %37 = vector.load %arg6[%c0_17, %c0_18] : memref<512x96xf32, #tpu.memory_space<vmem>>, vector<512x96xf32>
    tpu.vector_store %arg6[%c0_17, %c0_18], %36 {strides = array<i32>} : memref<512x96xf32, #tpu.memory_space<vmem>>, vector<512x96xf32>,
    return
  }
  func.func @transform_0(%arg0: i32) -> (i32, i32) {
    %c0_i32 = arith.constant 0 : i32
    %c0_i32_0 = arith.constant 0 : i32
    return %arg0, %c0_i32 : i32, i32
  }
  func.func @transform_1(%arg0: i32) -> (i32, i32) {
    %c0_i32 = arith.constant 0 : i32
    %c0_i32_0 = arith.constant 0 : i32
    %c0_i32_1 = arith.constant 0 : i32
    return %c0_i32, %c0_i32_0 : i32, i32
  }
  func.func @transform_2(%arg0: i32) -> (i32, i32) {
    %c0_i32 = arith.constant 0 : i32
    %c0_i32_0 = arith.constant 0 : i32
    %c0_i32_1 = arith.constant 0 : i32
    return %c0_i32, %c0_i32_0 : i32, i32
  }
  func.func @transform_3(%arg0: i32) -> (i32, i32) {
    %c0_i32 = arith.constant 0 : i32
    %c0_i32_0 = arith.constant 0 : i32
    %c0_i32_1 = arith.constant 0 : i32
    return %c0_i32, %c0_i32_0 : i32, i32
  }
  func.func @transform_4(%arg0: i32) -> (i32, i32) {
    %c0_i32 = arith.constant 0 : i32
    %c0_i32_0 = arith.constant 0 : i32
    %c0_i32_1 = arith.constant 0 : i32
    return %c0_i32, %c0_i32_0 : i32, i32
  }
  func.func @transform_5(%arg0: i32) -> (i32, i32) {
    %c0_i32 = arith.constant 0 : i32
    %c0_i32_0 = arith.constant 0 : i32
    return %arg0, %c0_i32 : i32, i32
  }
}

</mosaic_0001>

<llo_original>
// kernel: tpu_custom_call.1
$region0: #{tpu_custom_call.1}
  #allocation0 [shape = 'u32[]', space=smem, size = 0x4, offset = 0x4, fixed_abs, tag = 'smem constant byte address 0x4 - core index']
  #allocation1 [shape = 'u32[144,128]{1,0:T(1,128)}', space=vmem, size = 0x12000, scoped, tag = 'internal scratch']
  %s0 = inlined_call_operand.vmem [shape: f32[2048,96], index: 0, kind: input, shape index: {}]
  %s1 = inlined_call_operand.vmem [shape: bf16[96,192], index: 1, kind: input, shape index: {}]
  %s2 = inlined_call_operand.vmem [shape: f32[1,192], index: 2, kind: input, shape index: {}]
  %s3 = inlined_call_operand.vmem [shape: bf16[192,96], index: 3, kind: input, shape index: {}]
  %s4 = inlined_call_operand.vmem [shape: f32[1,96], index: 4, kind: input, shape index: {}]
  %s5 = inlined_call_operand.vmem [shape: f32[2048,96], index: 5, kind: output, shape index: {}]
  %s6 = sld [smem:[#allocation0]]
  $region53: #{tpu_custom_call.1} parent=0
    _
  %s8 = ssub.s32 1, %s6
  %s9 = scalar_select 0, %s8, %s6
  loop: start=0, step=1, limit=6
  $region2: #{tpu_custom_call.1} parent=0 // loop_pre_header
    _
  $region3: #{tpu_custom_call.1} parent=0 // loop_header
    %s11 = sphi 0, %s15
    %p12 = scmp.ge.s32.totalorder %s11, 6
    %s21 = sphi 0, %s23
    %s24 = sphi 0, %s21
    %s25 = sphi 0, %s24
    %s41 = sphi 0, %s25
    %s45 = sphi 0, %s45
    %s47 = sphi 0, %s45
    %s48 = sphi 0, %s47
    %s62 = sphi 0, %s48
    %s66 = sphi 0, %s66
    %s68 = sphi 0, %s66
    %s69 = sphi 0, %s68
    %s83 = sphi 0, %s69
    %s87 = sphi 0, %s87
    %s89 = sphi 0, %s87
    %s90 = sphi 0, %s89
    %s104 = sphi 0, %s90
    %s108 = sphi 0, %s108
    %s110 = sphi 0, %s108
    %s111 = sphi 0, %s110
    %s125 = sphi 0, %s111
    %s131 = sphi 0, %s133
    %s134 = sphi 0, %s131
    %s135 = sphi 0, %s134
    %s151 = sphi 0, %s135
  $region4: #{tpu_custom_call.1} parent=0 // loop_header_branch
    %14 = sbr.rel (%p12) target = $region8
  $region5: #{tpu_custom_call.1} parent=0 // loop_body
    %s16 = ssub.s32 %s11, 1
    %s17 = ssub.s32 %s11, 2
    %s18 = sadd.s32 %s11, 1
    %s19 = ssub.s32 %s11, %s18
    %p20 = scmp.eq.s32.totalorder %s19, 0
    %s22 = sadd.s32 %s21, 1
    %s23 = scalar_select %p20, %s21, %s22
    %p26 = pneg %p20
    %p27 = scmp.eq.s32.totalorder %s11, 3
    %p28 = por %p26, %p27
    %p29 = scmp.ne.s32.totalorder %s21, %s24
    %p30 = scmp.eq.s32.totalorder %s11, 0
    %p31 = por %p29, %p30
    %p32 = scmp.ne.s32.totalorder %s21, %s24
    %p33 = scmp.eq.s32.totalorder %s16, 3
    %p34 = por %p32, %p33
    %p35 = scmp.ne.s32.totalorder %s24, %s25
    %p36 = scmp.eq.s32.totalorder %s16, 0
    %p37 = por %p35, %p36
    %p38 = scmp.ne.s32.totalorder %s24, %s25
    %p39 = scmp.eq.s32.totalorder %s17, 3
    %p40 = por %p38, %p39
    %p42 = scmp.ne.s32.totalorder %s25, %s41
    %p43 = scmp.eq.s32.totalorder %s17, 0
    %p44 = por %p42, %p43
    %s46 = sadd.s32 %s45, 1
    %p49 = scmp.eq.s32.totalorder %s11, 3
    %p50 = scmp.ne.s32.totalorder %s45, %s47
    %p51 = scmp.eq.s32.totalorder %s11, 0
    %p52 = por %p50, %p51
    %p53 = scmp.ne.s32.totalorder %s45, %s47
    %p54 = scmp.eq.s32.totalorder %s16, 3
    %p55 = por %p53, %p54
    %p56 = scmp.ne.s32.totalorder %s47, %s48
    %p57 = scmp.eq.s32.totalorder %s16, 0
    %p58 = por %p56, %p57
    %p59 = scmp.ne.s32.totalorder %s47, %s48
    %p60 = scmp.eq.s32.totalorder %s17, 3
    %p61 = por %p59, %p60
    %p63 = scmp.ne.s32.totalorder %s48, %s62
    %p64 = scmp.eq.s32.totalorder %s17, 0
    %p65 = por %p63, %p64
    %s67 = sadd.s32 %s66, 1
    %p70 = scmp.eq.s32.totalorder %s11, 3
    %p71 = scmp.ne.s32.totalorder %s66, %s68
    %p72 = scmp.eq.s32.totalorder %s11, 0
    %p73 = por %p71, %p72
    %p74 = scmp.ne.s32.totalorder %s66, %s68
    %p75 = scmp.eq.s32.totalorder %s16, 3
    %p76 = por %p74, %p75
    %p77 = scmp.ne.s32.totalorder %s68, %s69
    %p78 = scmp.eq.s32.totalorder %s16, 0
    %p79 = por %p77, %p78
    %p80 = scmp.ne.s32.totalorder %s68, %s69
    %p81 = scmp.eq.s32.totalorder %s17, 3
    %p82 = por %p80, %p81
    %p84 = scmp.ne.s32.totalorder %s69, %s83
    %p85 = scmp.eq.s32.totalorder %s17, 0
    %p86 = por %p84, %p85
    %s88 = sadd.s32 %s87, 1
    %p91 = scmp.eq.s32.totalorder %s11, 3
    %p92 = scmp.ne.s32.totalorder %s87, %s89
    %p93 = scmp.eq.s32.totalorder %s11, 0
    %p94 = por %p92, %p93
    %p95 = scmp.ne.s32.totalorder %s87, %s89
    %p96 = scmp.eq.s32.totalorder %s16, 3
    %p97 = por %p95, %p96
    %p98 = scmp.ne.s32.totalorder %s89, %s90
    %p99 = scmp.eq.s32.totalorder %s16, 0
    %p100 = por %p98, %p99
    %p101 = scmp.ne.s32.totalorder %s89, %s90
    %p102 = scmp.eq.s32.totalorder %s17, 3
    %p103 = por %p101, %p102
    %p105 = scmp.ne.s32.totalorder %s90, %s104
    %p106 = scmp.eq.s32.totalorder %s17, 0
    %p107 = por %p105, %p106
    %s109 = sadd.s32 %s108, 1
    %p112 = scmp.eq.s32.totalorder %s11, 3
    %p113 = scmp.ne.s32.totalorder %s108, %s110
    %p114 = scmp.eq.s32.totalorder %s11, 0
    %p115 = por %p113, %p114
    %p116 = scmp.ne.s32.totalorder %s108, %s110
    %p117 = scmp.eq.s32.totalorder %s16, 3
    %p118 = por %p116, %p117
    %p119 = scmp.ne.s32.totalorder %s110, %s111
    %p120 = scmp.eq.s32.totalorder %s16, 0
    %p121 = por %p119, %p120
    %p122 = scmp.ne.s32.totalorder %s110, %s111
    %p123 = scmp.eq.s32.totalorder %s17, 3
    %p124 = por %p122, %p123
    %p126 = scmp.ne.s32.totalorder %s111, %s125
    %p127 = scmp.eq.s32.totalorder %s17, 0
    %p128 = por %p126, %p127
    %s129 = ssub.s32 %s11, %s18
    %p130 = scmp.eq.s32.totalorder %s129, 0
    %s132 = sadd.s32 %s131, 1
    %s133 = scalar_select %p130, %s131, %s132
    %p136 = pneg %p130
    %p137 = scmp.eq.s32.totalorder %s11, 3
    %p138 = por %p136, %p137
    %p139 = scmp.ne.s32.totalorder %s131, %s134
    %p140 = scmp.eq.s32.totalorder %s11, 0
    %p141 = por %p139, %p140
    %p142 = scmp.ne.s32.totalorder %s131, %s134
    %p143 = scmp.eq.s32.totalorder %s16, 3
    %p144 = por %p142, %p143
    %p145 = scmp.ne.s32.totalorder %s134, %s135
    %p146 = scmp.eq.s32.totalorder %s16, 0
    %p147 = por %p145, %p146
    %p148 = scmp.ne.s32.totalorder %s134, %s135
    %p149 = scmp.eq.s32.totalorder %s17, 3
    %p150 = por %p148, %p149
    %p152 = scmp.ne.s32.totalorder %s135, %s151
    %p153 = scmp.eq.s32.totalorder %s17, 0
    %p154 = por %p152, %p153
    %p155 = scmp.le.s32.totalorder 1, %s11
    %p156 = scmp.lt.s32.totalorder %s11, 5
    %p157 = pnand %p155, %p156
    %p158 = pneg %p157
    // Predicated region
    $region9: #{tpu_custom_call.1} parent=5 // pred_check
      _
    $region10: #{tpu_custom_call.1} parent=5 // pred_check_branch
      %160 = sbr.rel (%p157) target = $region12
    $region11: #{tpu_custom_call.1} parent=5 // pred_region
      %s161 = ssub.s32 %s11, 1
      // Predicated region
      $region13: #{tpu_custom_call.1} parent=11 // pred_check
        %p162 = pneg %p58
      $region14: #{tpu_custom_call.1} parent=11 // pred_check_branch
        %164 = sbr.rel (%p162) target = $region16
      $region15: #{tpu_custom_call.1} parent=11 // pred_region
        _
      $region16: #{tpu_custom_call.1} parent=11 // pred_fallthru
        _
      // Predicated region
      $region17: #{tpu_custom_call.1} parent=11 // pred_check
        %p165 = pneg %p79
      $region18: #{tpu_custom_call.1} parent=11 // pred_check_branch
        %167 = sbr.rel (%p165) target = $region20
      $region19: #{tpu_custom_call.1} parent=11 // pred_region
        _
      $region20: #{tpu_custom_call.1} parent=11 // pred_fallthru
        _
      // Predicated region
      $region21: #{tpu_custom_call.1} parent=11 // pred_check
        %p168 = pneg %p100
      $region22: #{tpu_custom_call.1} parent=11 // pred_check_branch
        %170 = sbr.rel (%p168) target = $region24
      $region23: #{tpu_custom_call.1} parent=11 // pred_region
        _
      $region24: #{tpu_custom_call.1} parent=11 // pred_fallthru
        _
      // Predicated region
      $region25: #{tpu_custom_call.1} parent=11 // pred_check
        %p171 = pneg %p121
      $region26: #{tpu_custom_call.1} parent=11 // pred_check_branch
        %173 = sbr.rel (%p171) target = $region28
      $region27: #{tpu_custom_call.1} parent=11 // pred_region
        _
      $region28: #{tpu_custom_call.1} parent=11 // pred_fallthru
        _
    $region12: #{tpu_custom_call.1} parent=5 // pred_fallthru
      _
    %p174 = scmp.lt.s32.totalorder %s11, 4
    // Predicated region
    $region29: #{tpu_custom_call.1} parent=5 // pred_check
      %p175 = pneg %p174
    $region30: #{tpu_custom_call.1} parent=5 // pred_check_branch
      %177 = sbr.rel (%p175) target = $region32
    $region31: #{tpu_custom_call.1} parent=5 // pred_region
      // Predicated region
      $region33: #{tpu_custom_call.1} parent=31 // pred_check
        %p178 = pneg %p31
      $region34: #{tpu_custom_call.1} parent=31 // pred_check_branch
        %180 = sbr.rel (%p178) target = $region36
      $region35: #{tpu_custom_call.1} parent=31 // pred_region
        %s181 = smul.u32 64, %s11
        %p182 = scmp.lt.s32.totalorder %s181, 255
        %s183 = scalar_select %p182, %s181, 255
        %s184 = smul.addr %s183, 8
        %s185 = scalar_lea.vmem %s0, %s184
        %s186 = smul.u32 64, %s11
      $region36: #{tpu_custom_call.1} parent=31 // pred_fallthru
        _
    $region32: #{tpu_custom_call.1} parent=5 // pred_fallthru
      _
    %p187 = scmp.le.s32.totalorder 1, %s11
    %p188 = scmp.lt.s32.totalorder %s11, 5
    %p189 = pnand %p187, %p188
    %p190 = pneg %p189
    // Predicated region
    $region37: #{tpu_custom_call.1} parent=5 // pred_check
      _
    $region38: #{tpu_custom_call.1} parent=5 // pred_check_branch
      %192 = sbr.rel (%p189) target = $region40
    $region39: #{tpu_custom_call.1} parent=5 // pred_region
      %s193 = ssub.s32 %s11, 1
      %s194 = smul.u32 64, %s16
      %p195 = scmp.lt.s32.totalorder %s194, 255
      %s196 = scalar_select %p195, %s194, 255
      %s197 = smul.addr %s196, 8
      %s198 = scalar_lea.vmem %s0, %s197
      %p199 = pneg %p37
      %p200 = pneg %p34
      %p201 = pneg %p58
      %p202 = pneg %p55
      %p203 = pneg %p79
      %p204 = pneg %p76
      %p205 = pneg %p100
      %p206 = pneg %p97
      %p207 = pneg %p121
      %p208 = pneg %p118
      %p209 = pneg %p147
      %p210 = pneg %p144
      %s211 = smul.u32 64, %s16
      %p212 = scmp.lt.s32.totalorder %s211, 255
      %s213 = scalar_select %p212, %s211, 255
      %s214 = smul.addr %s213, 8
      %s215 = scalar_lea.vmem %s5, %s214
      %s216 = smul.u32 64, %s16
      %p217 = scmp.lt.s32.totalorder %s216, 255
      %s218 = scalar_select %p217, %s216, 255
      %s219 = smul.addr %s218, 8
      %s220 = scalar_lea.vmem %s0, %s219
      %s221 = smul.u32 64, %s16
      %s222 = smul.u32 64, %s16
      %p223 = scmp.lt.s32.totalorder %s222, 255
      %s224 = scalar_select %p223, %s222, 255
      %s225 = smul.addr %s224, 8
      %s226 = scalar_lea.vmem %s5, %s225
      %s227 = smul.u32 64, %s16
      %v229 = vld [vmem:[%s220] sm:$0xff]
      %v230 = vld [vmem:[%s220 + $0x8] sm:$0xff]
      %v231 = vld [vmem:[%s220 + $0x10] sm:$0xff]
      %v232 = vld [vmem:[%s220 + $0x18] sm:$0xff]
      %v233 = vld [vmem:[%s220 + $0x20] sm:$0xff]
      %v234 = vld [vmem:[%s220 + $0x28] sm:$0xff]
      %v235 = vld [vmem:[%s220 + $0x30] sm:$0xff]
      %v236 = vld [vmem:[%s220 + $0x38] sm:$0xff]
      %v237 = vld [vmem:[%s220 + $0x40] sm:$0xff]
      %v238 = vld [vmem:[%s220 + $0x48] sm:$0xff]
      %v239 = vld [vmem:[%s220 + $0x50] sm:$0xff]
      %v240 = vld [vmem:[%s220 + $0x58] sm:$0xff]
      %v241 = vld [vmem:[%s220 + $0x60] sm:$0xff]
      %v242 = vld [vmem:[%s220 + $0x68] sm:$0xff]
      %v243 = vld [vmem:[%s220 + $0x70] sm:$0xff]
      %v244 = vld [vmem:[%s220 + $0x78] sm:$0xff]
      %v245 = vld [vmem:[%s220 + $0x80] sm:$0xff]
      %v246 = vld [vmem:[%s220 + $0x88] sm:$0xff]
      %v247 = vld [vmem:[%s220 + $0x90] sm:$0xff]
      %v248 = vld [vmem:[%s220 + $0x98] sm:$0xff]
      %v249 = vld [vmem:[%s220 + $0xa0] sm:$0xff]
      %v250 = vld [vmem:[%s220 + $0xa8] sm:$0xff]
      %v251 = vld [vmem:[%s220 + $0xb0] sm:$0xff]
      %v252 = vld [vmem:[%s220 + $0xb8] sm:$0xff]
      %v253 = vld [vmem:[%s220 + $0xc0] sm:$0xff]
      %v254 = vld [vmem:[%s220 + $0xc8] sm:$0xff]
      %v255 = vld [vmem:[%s220 + $0xd0] sm:$0xff]
      %v256 = vld [vmem:[%s220 + $0xd8] sm:$0xff]
      %v257 = vld [vmem:[%s220 + $0xe0] sm:$0xff]
      %v258 = vld [vmem:[%s220 + $0xe8] sm:$0xff]
      %v259 = vld [vmem:[%s220 + $0xf0] sm:$0xff]
      %v260 = vld [vmem:[%s220 + $0xf8] sm:$0xff]
      %v261 = vld [vmem:[%s220 + $0x100] sm:$0xff]
      %v262 = vld [vmem:[%s220 + $0x108] sm:$0xff]
      %v263 = vld [vmem:[%s220 + $0x110] sm:$0xff]
      %v264 = vld [vmem:[%s220 + $0x118] sm:$0xff]
      %v265 = vld [vmem:[%s220 + $0x120] sm:$0xff]
      %v266 = vld [vmem:[%s220 + $0x128] sm:$0xff]
      %v267 = vld [vmem:[%s220 + $0x130] sm:$0xff]
      %v268 = vld [vmem:[%s220 + $0x138] sm:$0xff]
      %v269 = vld [vmem:[%s220 + $0x140] sm:$0xff]
      %v270 = vld [vmem:[%s220 + $0x148] sm:$0xff]
      %v271 = vld [vmem:[%s220 + $0x150] sm:$0xff]
      %v272 = vld [vmem:[%s220 + $0x158] sm:$0xff]
      %v273 = vld [vmem:[%s220 + $0x160] sm:$0xff]
      %v274 = vld [vmem:[%s220 + $0x168] sm:$0xff]
      %v275 = vld [vmem:[%s220 + $0x170] sm:$0xff]
      %v276 = vld [vmem:[%s220 + $0x178] sm:$0xff]
      %v277 = vld [vmem:[%s220 + $0x180] sm:$0xff]
      %v278 = vld [vmem:[%s220 + $0x188] sm:$0xff]
      %v279 = vld [vmem:[%s220 + $0x190] sm:$0xff]
      %v280 = vld [vmem:[%s220 + $0x198] sm:$0xff]
      %v281 = vld [vmem:[%s220 + $0x1a0] sm:$0xff]
      %v282 = vld [vmem:[%s220 + $0x1a8] sm:$0xff]
      %v283 = vld [vmem:[%s220 + $0x1b0] sm:$0xff]
      %v284 = vld [vmem:[%s220 + $0x1b8] sm:$0xff]
      %v285 = vld [vmem:[%s220 + $0x1c0] sm:$0xff]
      %v286 = vld [vmem:[%s220 + $0x1c8] sm:$0xff]
      %v287 = vld [vmem:[%s220 + $0x1d0] sm:$0xff]
      %v288 = vld [vmem:[%s220 + $0x1d8] sm:$0xff]
      %v289 = vld [vmem:[%s220 + $0x1e0] sm:$0xff]
      %v290 = vld [vmem:[%s220 + $0x1e8] sm:$0xff]
      %v291 = vld [vmem:[%s220 + $0x1f0] sm:$0xff]
      %v292 = vld [vmem:[%s220 + $0x1f8] sm:$0xff]
      %vm293 = vcmask 785408
      %v294 = vsel %vm293, %v229, 0.0
      %295 = vadd.xlane.f32.xlu0 %v294
      %v296 = vpop.xlane.xlu0 %295
      %v297 = vsel %vm293, %v230, 0.0
      %298 = vadd.xlane.f32.xlu0 %v297
      %v299 = vpop.xlane.xlu0 %298
      %v300 = vsel %vm293, %v231, 0.0
      %301 = vadd.xlane.f32.xlu0 %v300
      %v302 = vpop.xlane.xlu0 %301
      %v303 = vsel %vm293, %v232, 0.0
      %304 = vadd.xlane.f32.xlu0 %v303
      %v305 = vpop.xlane.xlu0 %304
      %v306 = vsel %vm293, %v233, 0.0
      %307 = vadd.xlane.f32.xlu0 %v306
      %v308 = vpop.xlane.xlu0 %307
      %v309 = vsel %vm293, %v234, 0.0
      %310 = vadd.xlane.f32.xlu0 %v309
      %v311 = vpop.xlane.xlu0 %310
      %v312 = vsel %vm293, %v235, 0.0
      %313 = vadd.xlane.f32.xlu0 %v312
      %v314 = vpop.xlane.xlu0 %313
      %v315 = vsel %vm293, %v236, 0.0
      %316 = vadd.xlane.f32.xlu0 %v315
      %v317 = vpop.xlane.xlu0 %316
      %v318 = vsel %vm293, %v237, 0.0
      %319 = vadd.xlane.f32.xlu0 %v318
      %v320 = vpop.xlane.xlu0 %319
      %v321 = vsel %vm293, %v238, 0.0
      %322 = vadd.xlane.f32.xlu0 %v321
      %v323 = vpop.xlane.xlu0 %322
      %v324 = vsel %vm293, %v239, 0.0
      %325 = vadd.xlane.f32.xlu0 %v324
      %v326 = vpop.xlane.xlu0 %325
      %v327 = vsel %vm293, %v240, 0.0
      %328 = vadd.xlane.f32.xlu0 %v327
      %v329 = vpop.xlane.xlu0 %328
      %v330 = vsel %vm293, %v241, 0.0
      %331 = vadd.xlane.f32.xlu0 %v330
      %v332 = vpop.xlane.xlu0 %331
      %v333 = vsel %vm293, %v242, 0.0
      %334 = vadd.xlane.f32.xlu0 %v333
      %v335 = vpop.xlane.xlu0 %334
      %v336 = vsel %vm293, %v243, 0.0
      %337 = vadd.xlane.f32.xlu0 %v336
      %v338 = vpop.xlane.xlu0 %337
      %v339 = vsel %vm293, %v244, 0.0
      %340 = vadd.xlane.f32.xlu0 %v339
      %v341 = vpop.xlane.xlu0 %340
      %v342 = vsel %vm293, %v245, 0.0
      %343 = vadd.xlane.f32.xlu0 %v342
      %v344 = vpop.xlane.xlu0 %343
      %v345 = vsel %vm293, %v246, 0.0
      %346 = vadd.xlane.f32.xlu0 %v345
      %v347 = vpop.xlane.xlu0 %346
      %v348 = vsel %vm293, %v247, 0.0
      %349 = vadd.xlane.f32.xlu0 %v348
      %v350 = vpop.xlane.xlu0 %349
      %v351 = vsel %vm293, %v248, 0.0
      %352 = vadd.xlane.f32.xlu0 %v351
      %v353 = vpop.xlane.xlu0 %352
      %v354 = vsel %vm293, %v249, 0.0
      %355 = vadd.xlane.f32.xlu0 %v354
      %v356 = vpop.xlane.xlu0 %355
      %v357 = vsel %vm293, %v250, 0.0
      %358 = vadd.xlane.f32.xlu0 %v357
      %v359 = vpop.xlane.xlu0 %358
      %v360 = vsel %vm293, %v251, 0.0
      %361 = vadd.xlane.f32.xlu0 %v360
      %v362 = vpop.xlane.xlu0 %361
      %v363 = vsel %vm293, %v252, 0.0
      %364 = vadd.xlane.f32.xlu0 %v363
      %v365 = vpop.xlane.xlu0 %364
      %v366 = vsel %vm293, %v253, 0.0
      %367 = vadd.xlane.f32.xlu0 %v366
      %v368 = vpop.xlane.xlu0 %367
      %v369 = vsel %vm293, %v254, 0.0
      %370 = vadd.xlane.f32.xlu0 %v369
      %v371 = vpop.xlane.xlu0 %370
      %v372 = vsel %vm293, %v255, 0.0
      %373 = vadd.xlane.f32.xlu0 %v372
      %v374 = vpop.xlane.xlu0 %373
      %v375 = vsel %vm293, %v256, 0.0
      %376 = vadd.xlane.f32.xlu0 %v375
      %v377 = vpop.xlane.xlu0 %376
      %v378 = vsel %vm293, %v257, 0.0
      %379 = vadd.xlane.f32.xlu0 %v378
      %v380 = vpop.xlane.xlu0 %379
      %v381 = vsel %vm293, %v258, 0.0
      %382 = vadd.xlane.f32.xlu0 %v381
      %v383 = vpop.xlane.xlu0 %382
      %v384 = vsel %vm293, %v259, 0.0
      %385 = vadd.xlane.f32.xlu0 %v384
      %v386 = vpop.xlane.xlu0 %385
      %v387 = vsel %vm293, %v260, 0.0
      %388 = vadd.xlane.f32.xlu0 %v387
      %v389 = vpop.xlane.xlu0 %388
      %v390 = vsel %vm293, %v261, 0.0
      %391 = vadd.xlane.f32.xlu0 %v390
      %v392 = vpop.xlane.xlu0 %391
      %v393 = vsel %vm293, %v262, 0.0
      %394 = vadd.xlane.f32.xlu0 %v393
      %v395 = vpop.xlane.xlu0 %394
      %v396 = vsel %vm293, %v263, 0.0
      %397 = vadd.xlane.f32.xlu0 %v396
      %v398 = vpop.xlane.xlu0 %397
      %v399 = vsel %vm293, %v264, 0.0
      %400 = vadd.xlane.f32.xlu0 %v399
      %v401 = vpop.xlane.xlu0 %400
      %v402 = vsel %vm293, %v265, 0.0
      %403 = vadd.xlane.f32.xlu0 %v402
      %v404 = vpop.xlane.xlu0 %403
      %v405 = vsel %vm293, %v266, 0.0
      %406 = vadd.xlane.f32.xlu0 %v405
      %v407 = vpop.xlane.xlu0 %406
      %v408 = vsel %vm293, %v267, 0.0
      %409 = vadd.xlane.f32.xlu0 %v408
      %v410 = vpop.xlane.xlu0 %409
      %v411 = vsel %vm293, %v268, 0.0
      %412 = vadd.xlane.f32.xlu0 %v411
      %v413 = vpop.xlane.xlu0 %412
      %v414 = vsel %vm293, %v269, 0.0
      %415 = vadd.xlane.f32.xlu0 %v414
      %v416 = vpop.xlane.xlu0 %415
      %v417 = vsel %vm293, %v270, 0.0
      %418 = vadd.xlane.f32.xlu0 %v417
      %v419 = vpop.xlane.xlu0 %418
      %v420 = vsel %vm293, %v271, 0.0
      %421 = vadd.xlane.f32.xlu0 %v420
      %v422 = vpop.xlane.xlu0 %421
      %v423 = vsel %vm293, %v272, 0.0
      %424 = vadd.xlane.f32.xlu0 %v423
      %v425 = vpop.xlane.xlu0 %424
      %v426 = vsel %vm293, %v273, 0.0
      %427 = vadd.xlane.f32.xlu0 %v426
      %v428 = vpop.xlane.xlu0 %427
      %v429 = vsel %vm293, %v274, 0.0
      %430 = vadd.xlane.f32.xlu0 %v429
      %v431 = vpop.xlane.xlu0 %430
      %v432 = vsel %vm293, %v275, 0.0
      %433 = vadd.xlane.f32.xlu0 %v432
      %v434 = vpop.xlane.xlu0 %433
      %v435 = vsel %vm293, %v276, 0.0
      %436 = vadd.xlane.f32.xlu0 %v435
      %v437 = vpop.xlane.xlu0 %436
      %v438 = vsel %vm293, %v277, 0.0
      %439 = vadd.xlane.f32.xlu0 %v438
      %v440 = vpop.xlane.xlu0 %439
      %v441 = vsel %vm293, %v278, 0.0
      %442 = vadd.xlane.f32.xlu0 %v441
      %v443 = vpop.xlane.xlu0 %442
      %v444 = vsel %vm293, %v279, 0.0
      %445 = vadd.xlane.f32.xlu0 %v444
      %v446 = vpop.xlane.xlu0 %445
      %v447 = vsel %vm293, %v280, 0.0
      %448 = vadd.xlane.f32.xlu0 %v447
      %v449 = vpop.xlane.xlu0 %448
      %v450 = vsel %vm293, %v281, 0.0
      %451 = vadd.xlane.f32.xlu0 %v450
      %v452 = vpop.xlane.xlu0 %451
      %v453 = vsel %vm293, %v282, 0.0
      %454 = vadd.xlane.f32.xlu0 %v453
      %v455 = vpop.xlane.xlu0 %454
      %v456 = vsel %vm293, %v283, 0.0
      %457 = vadd.xlane.f32.xlu0 %v456
      %v458 = vpop.xlane.xlu0 %457
      %v459 = vsel %vm293, %v284, 0.0
      %460 = vadd.xlane.f32.xlu0 %v459
      %v461 = vpop.xlane.xlu0 %460
      %v462 = vsel %vm293, %v285, 0.0
      %463 = vadd.xlane.f32.xlu0 %v462
      %v464 = vpop.xlane.xlu0 %463
      %v465 = vsel %vm293, %v286, 0.0
      %466 = vadd.xlane.f32.xlu0 %v465
      %v467 = vpop.xlane.xlu0 %466
      %v468 = vsel %vm293, %v287, 0.0
      %469 = vadd.xlane.f32.xlu0 %v468
      %v470 = vpop.xlane.xlu0 %469
      %v471 = vsel %vm293, %v288, 0.0
      %472 = vadd.xlane.f32.xlu0 %v471
      %v473 = vpop.xlane.xlu0 %472
      %v474 = vsel %vm293, %v289, 0.0
      %475 = vadd.xlane.f32.xlu0 %v474
      %v476 = vpop.xlane.xlu0 %475
      %v477 = vsel %vm293, %v290, 0.0
      %478 = vadd.xlane.f32.xlu0 %v477
      %v479 = vpop.xlane.xlu0 %478
      %v480 = vsel %vm293, %v291, 0.0
      %481 = vadd.xlane.f32.xlu0 %v480
      %v482 = vpop.xlane.xlu0 %481
      %v483 = vsel %vm293, %v292, 0.0
      %484 = vadd.xlane.f32.xlu0 %v483
      %v485 = vpop.xlane.xlu0 %484
      %v486 = vrcp.pop 96.0
      %v487 = vmul.f32 %v296, %v486
      %v488 = vmul.f32 %v299, %v486
      %v489 = vmul.f32 %v302, %v486
      %v490 = vmul.f32 %v305, %v486
      %v491 = vmul.f32 %v308, %v486
      %v492 = vmul.f32 %v311, %v486
      %v493 = vmul.f32 %v314, %v486
      %v494 = vmul.f32 %v317, %v486
      %v495 = vmul.f32 %v320, %v486
      %v496 = vmul.f32 %v323, %v486
      %v497 = vmul.f32 %v326, %v486
      %v498 = vmul.f32 %v329, %v486
      %v499 = vmul.f32 %v332, %v486
      %v500 = vmul.f32 %v335, %v486
      %v501 = vmul.f32 %v338, %v486
      %v502 = vmul.f32 %v341, %v486
      %v503 = vmul.f32 %v344, %v486
      %v504 = vmul.f32 %v347, %v486
      %v505 = vmul.f32 %v350, %v486
      %v506 = vmul.f32 %v353, %v486
      %v507 = vmul.f32 %v356, %v486
      %v508 = vmul.f32 %v359, %v486
      %v509 = vmul.f32 %v362, %v486
      %v510 = vmul.f32 %v365, %v486
      %v511 = vmul.f32 %v368, %v486
      %v512 = vmul.f32 %v371, %v486
      %v513 = vmul.f32 %v374, %v486
      %v514 = vmul.f32 %v377, %v486
      %v515 = vmul.f32 %v380, %v486
      %v516 = vmul.f32 %v383, %v486
      %v517 = vmul.f32 %v386, %v486
      %v518 = vmul.f32 %v389, %v486
      %v519 = vmul.f32 %v392, %v486
      %v520 = vmul.f32 %v395, %v486
      %v521 = vmul.f32 %v398, %v486
      %v522 = vmul.f32 %v401, %v486
      %v523 = vmul.f32 %v404, %v486
      %v524 = vmul.f32 %v407, %v486
      %v525 = vmul.f32 %v410, %v486
      %v526 = vmul.f32 %v413, %v486
      %v527 = vmul.f32 %v416, %v486
      %v528 = vmul.f32 %v419, %v486
      %v529 = vmul.f32 %v422, %v486
      %v530 = vmul.f32 %v425, %v486
      %v531 = vmul.f32 %v428, %v486
      %v532 = vmul.f32 %v431, %v486
      %v533 = vmul.f32 %v434, %v486
      %v534 = vmul.f32 %v437, %v486
      %v535 = vmul.f32 %v440, %v486
      %v536 = vmul.f32 %v443, %v486
      %v537 = vmul.f32 %v446, %v486
      %v538 = vmul.f32 %v449, %v486
      %v539 = vmul.f32 %v452, %v486
      %v540 = vmul.f32 %v455, %v486
      %v541 = vmul.f32 %v458, %v486
      %v542 = vmul.f32 %v461, %v486
      %v543 = vmul.f32 %v464, %v486
      %v544 = vmul.f32 %v467, %v486
      %v545 = vmul.f32 %v470, %v486
      %v546 = vmul.f32 %v473, %v486
      %v547 = vmul.f32 %v476, %v486
      %v548 = vmul.f32 %v479, %v486
      %v549 = vmul.f32 %v482, %v486
      %v550 = vmul.f32 %v485, %v486
      %v551 = vsub.f32 %v229, %v487
      %v552 = vsub.f32 %v230, %v488
      %v553 = vsub.f32 %v231, %v489
      %v554 = vsub.f32 %v232, %v490
      %v555 = vsub.f32 %v233, %v491
      %v556 = vsub.f32 %v234, %v492
      %v557 = vsub.f32 %v235, %v493
      %v558 = vsub.f32 %v236, %v494
      %v559 = vsub.f32 %v237, %v495
      %v560 = vsub.f32 %v238, %v496
      %v561 = vsub.f32 %v239, %v497
      %v562 = vsub.f32 %v240, %v498
      %v563 = vsub.f32 %v241, %v499
      %v564 = vsub.f32 %v242, %v500
      %v565 = vsub.f32 %v243, %v501
      %v566 = vsub.f32 %v244, %v502
      %v567 = vsub.f32 %v245, %v503
      %v568 = vsub.f32 %v246, %v504
      %v569 = vsub.f32 %v247, %v505
      %v570 = vsub.f32 %v248, %v506
      %v571 = vsub.f32 %v249, %v507
      %v572 = vsub.f32 %v250, %v508
      %v573 = vsub.f32 %v251, %v509
      %v574 = vsub.f32 %v252, %v510
      %v575 = vsub.f32 %v253, %v511
      %v576 = vsub.f32 %v254, %v512
      %v577 = vsub.f32 %v255, %v513
      %v578 = vsub.f32 %v256, %v514
      %v579 = vsub.f32 %v257, %v515
      %v580 = vsub.f32 %v258, %v516
      %v581 = vsub.f32 %v259, %v517
      %v582 = vsub.f32 %v260, %v518
      %v583 = vsub.f32 %v261, %v519
      %v584 = vsub.f32 %v262, %v520
      %v585 = vsub.f32 %v263, %v521
      %v586 = vsub.f32 %v264, %v522
      %v587 = vsub.f32 %v265, %v523
      %v588 = vsub.f32 %v266, %v524
      %v589 = vsub.f32 %v267, %v525
      %v590 = vsub.f32 %v268, %v526
      %v591 = vsub.f32 %v269, %v527
      %v592 = vsub.f32 %v270, %v528
      %v593 = vsub.f32 %v271, %v529
      %v594 = vsub.f32 %v272, %v530
      %v595 = vsub.f32 %v273, %v531
      %v596 = vsub.f32 %v274, %v532
      %v597 = vsub.f32 %v275, %v533
      %v598 = vsub.f32 %v276, %v534
      %v599 = vsub.f32 %v277, %v535
      %v600 = vsub.f32 %v278, %v536
      %v601 = vsub.f32 %v279, %v537
      %v602 = vsub.f32 %v280, %v538
      %v603 = vsub.f32 %v281, %v539
      %v604 = vsub.f32 %v282, %v540
      %v605 = vsub.f32 %v283, %v541
      %v606 = vsub.f32 %v284, %v542
      %v607 = vsub.f32 %v285, %v543
      %v608 = vsub.f32 %v286, %v544
      %v609 = vsub.f32 %v287, %v545
      %v610 = vsub.f32 %v288, %v546
      %v611 = vsub.f32 %v289, %v547
      %v612 = vsub.f32 %v290, %v548
      %v613 = vsub.f32 %v291, %v549
      %v614 = vsub.f32 %v292, %v550
      %v615 = vmul.f32 %v551, %v551
      %v616 = vmul.f32 %v552, %v552
      %v617 = vmul.f32 %v553, %v553
      %v618 = vmul.f32 %v554, %v554
      %v619 = vmul.f32 %v555, %v555
      %v620 = vmul.f32 %v556, %v556
      %v621 = vmul.f32 %v557, %v557
      %v622 = vmul.f32 %v558, %v558
      %v623 = vmul.f32 %v559, %v559
      %v624 = vmul.f32 %v560, %v560
      %v625 = vmul.f32 %v561, %v561
      %v626 = vmul.f32 %v562, %v562
      %v627 = vmul.f32 %v563, %v563
      %v628 = vmul.f32 %v564, %v564
      %v629 = vmul.f32 %v565, %v565
      %v630 = vmul.f32 %v566, %v566
      %v631 = vmul.f32 %v567, %v567
      %v632 = vmul.f32 %v568, %v568
      %v633 = vmul.f32 %v569, %v569
      %v634 = vmul.f32 %v570, %v570
      %v635 = vmul.f32 %v571, %v571
      %v636 = vmul.f32 %v572, %v572
      %v637 = vmul.f32 %v573, %v573
      %v638 = vmul.f32 %v574, %v574
      %v639 = vmul.f32 %v575, %v575
      %v640 = vmul.f32 %v576, %v576
      %v641 = vmul.f32 %v577, %v577
      %v642 = vmul.f32 %v578, %v578
      %v643 = vmul.f32 %v579, %v579
      %v644 = vmul.f32 %v580, %v580
      %v645 = vmul.f32 %v581, %v581
      %v646 = vmul.f32 %v582, %v582
      %v647 = vmul.f32 %v583, %v583
      %v648 = vmul.f32 %v584, %v584
      %v649 = vmul.f32 %v585, %v585
      %v650 = vmul.f32 %v586, %v586
      %v651 = vmul.f32 %v587, %v587
      %v652 = vmul.f32 %v588, %v588
      %v653 = vmul.f32 %v589, %v589
      %v654 = vmul.f32 %v590, %v590
      %v655 = vmul.f32 %v591, %v591
      %v656 = vmul.f32 %v592, %v592
      %v657 = vmul.f32 %v593, %v593
      %v658 = vmul.f32 %v594, %v594
      %v659 = vmul.f32 %v595, %v595
      %v660 = vmul.f32 %v596, %v596
      %v661 = vmul.f32 %v597, %v597
      %v662 = vmul.f32 %v598, %v598
      %v663 = vmul.f32 %v599, %v599
      %v664 = vmul.f32 %v600, %v600
      %v665 = vmul.f32 %v601, %v601
      %v666 = vmul.f32 %v602, %v602
      %v667 = vmul.f32 %v603, %v603
      %v668 = vmul.f32 %v604, %v604
      %v669 = vmul.f32 %v605, %v605
      %v670 = vmul.f32 %v606, %v606
      %v671 = vmul.f32 %v607, %v607
      %v672 = vmul.f32 %v608, %v608
      %v673 = vmul.f32 %v609, %v609
      %v674 = vmul.f32 %v610, %v610
      %v675 = vmul.f32 %v611, %v611
      %v676 = vmul.f32 %v612, %v612
      %v677 = vmul.f32 %v613, %v613
      %v678 = vmul.f32 %v614, %v614
      %v679 = vsel %vm293, %v615, 0.0
      %680 = vadd.xlane.f32.xlu0 %v679
      %v681 = vpop.xlane.xlu0 %680
      %v682 = vsel %vm293, %v616, 0.0
      %683 = vadd.xlane.f32.xlu0 %v682
      %v684 = vpop.xlane.xlu0 %683
      %v685 = vsel %vm293, %v617, 0.0
      %686 = vadd.xlane.f32.xlu0 %v685
      %v687 = vpop.xlane.xlu0 %686
      %v688 = vsel %vm293, %v618, 0.0
      %689 = vadd.xlane.f32.xlu0 %v688
      %v690 = vpop.xlane.xlu0 %689
      %v691 = vsel %vm293, %v619, 0.0
      %692 = vadd.xlane.f32.xlu0 %v691
      %v693 = vpop.xlane.xlu0 %692
      %v694 = vsel %vm293, %v620, 0.0
      %695 = vadd.xlane.f32.xlu0 %v694
      %v696 = vpop.xlane.xlu0 %695
      %v697 = vsel %vm293, %v621, 0.0
      %698 = vadd.xlane.f32.xlu0 %v697
      %v699 = vpop.xlane.xlu0 %698
      %v700 = vsel %vm293, %v622, 0.0
      %701 = vadd.xlane.f32.xlu0 %v700
      %v702 = vpop.xlane.xlu0 %701
      %v703 = vsel %vm293, %v623, 0.0
      %704 = vadd.xlane.f32.xlu0 %v703
      %v705 = vpop.xlane.xlu0 %704
      %v706 = vsel %vm293, %v624, 0.0
      %707 = vadd.xlane.f32.xlu0 %v706
      %v708 = vpop.xlane.xlu0 %707
      %v709 = vsel %vm293, %v625, 0.0
      %710 = vadd.xlane.f32.xlu0 %v709
      %v711 = vpop.xlane.xlu0 %710
      %v712 = vsel %vm293, %v626, 0.0
      %713 = vadd.xlane.f32.xlu0 %v712
      %v714 = vpop.xlane.xlu0 %713
      %v715 = vsel %vm293, %v627, 0.0
      %716 = vadd.xlane.f32.xlu0 %v715
      %v717 = vpop.xlane.xlu0 %716
      %v718 = vsel %vm293, %v628, 0.0
      %719 = vadd.xlane.f32.xlu0 %v718
      %v720 = vpop.xlane.xlu0 %719
      %v721 = vsel %vm293, %v629, 0.0
      %722 = vadd.xlane.f32.xlu0 %v721
      %v723 = vpop.xlane.xlu0 %722
      %v724 = vsel %vm293, %v630, 0.0
      %725 = vadd.xlane.f32.xlu0 %v724
      %v726 = vpop.xlane.xlu0 %725
      %v727 = vsel %vm293, %v631, 0.0
      %728 = vadd.xlane.f32.xlu0 %v727
      %v729 = vpop.xlane.xlu0 %728
      %v730 = vsel %vm293, %v632, 0.0
      %731 = vadd.xlane.f32.xlu0 %v730
      %v732 = vpop.xlane.xlu0 %731
      %v733 = vsel %vm293, %v633, 0.0
      %734 = vadd.xlane.f32.xlu0 %v733
      %v735 = vpop.xlane.xlu0 %734
      %v736 = vsel %vm293, %v634, 0.0
      %737 = vadd.xlane.f32.xlu0 %v736
      %v738 = vpop.xlane.xlu0 %737
      %v739 = vsel %vm293, %v635, 0.0
      %740 = vadd.xlane.f32.xlu0 %v739
      %v741 = vpop.xlane.xlu0 %740
      %v742 = vsel %vm293, %v636, 0.0
      %743 = vadd.xlane.f32.xlu0 %v742
      %v744 = vpop.xlane.xlu0 %743
      %v745 = vsel %vm293, %v637, 0.0
      %746 = vadd.xlane.f32.xlu0 %v745
      %v747 = vpop.xlane.xlu0 %746
      %v748 = vsel %vm293, %v638, 0.0
      %749 = vadd.xlane.f32.xlu0 %v748
      %v750 = vpop.xlane.xlu0 %749
      %v751 = vsel %vm293, %v639, 0.0
      %752 = vadd.xlane.f32.xlu0 %v751
      %v753 = vpop.xlane.xlu0 %752
      %v754 = vsel %vm293, %v640, 0.0
      %755 = vadd.xlane.f32.xlu0 %v754
      %v756 = vpop.xlane.xlu0 %755
      %v757 = vsel %vm293, %v641, 0.0
      %758 = vadd.xlane.f32.xlu0 %v757
      %v759 = vpop.xlane.xlu0 %758
      %v760 = vsel %vm293, %v642, 0.0
      %761 = vadd.xlane.f32.xlu0 %v760
      %v762 = vpop.xlane.xlu0 %761
      %v763 = vsel %vm293, %v643, 0.0
      %764 = vadd.xlane.f32.xlu0 %v763
      %v765 = vpop.xlane.xlu0 %764
      %v766 = vsel %vm293, %v644, 0.0
      %767 = vadd.xlane.f32.xlu0 %v766
      %v768 = vpop.xlane.xlu0 %767
      %v769 = vsel %vm293, %v645, 0.0
      %770 = vadd.xlane.f32.xlu0 %v769
      %v771 = vpop.xlane.xlu0 %770
      %v772 = vsel %vm293, %v646, 0.0
      %773 = vadd.xlane.f32.xlu0 %v772
      %v774 = vpop.xlane.xlu0 %773
      %v775 = vsel %vm293, %v647, 0.0
      %776 = vadd.xlane.f32.xlu0 %v775
      %v777 = vpop.xlane.xlu0 %776
      %v778 = vsel %vm293, %v648, 0.0
      %779 = vadd.xlane.f32.xlu0 %v778
      %v780 = vpop.xlane.xlu0 %779
      %v781 = vsel %vm293, %v649, 0.0
      %782 = vadd.xlane.f32.xlu0 %v781
      %v783 = vpop.xlane.xlu0 %782
      %v784 = vsel %vm293, %v650, 0.0
      %785 = vadd.xlane.f32.xlu0 %v784
      %v786 = vpop.xlane.xlu0 %785
      %v787 = vsel %vm293, %v651, 0.0
      %788 = vadd.xlane.f32.xlu0 %v787
      %v789 = vpop.xlane.xlu0 %788
      %v790 = vsel %vm293, %v652, 0.0
      %791 = vadd.xlane.f32.xlu0 %v790
      %v792 = vpop.xlane.xlu0 %791
      %v793 = vsel %vm293, %v653, 0.0
      %794 = vadd.xlane.f32.xlu0 %v793
      %v795 = vpop.xlane.xlu0 %794
      %v796 = vsel %vm293, %v654, 0.0
      %797 = vadd.xlane.f32.xlu0 %v796
      %v798 = vpop.xlane.xlu0 %797
      %v799 = vsel %vm293, %v655, 0.0
      %800 = vadd.xlane.f32.xlu0 %v799
      %v801 = vpop.xlane.xlu0 %800
      %v802 = vsel %vm293, %v656, 0.0
      %803 = vadd.xlane.f32.xlu0 %v802
      %v804 = vpop.xlane.xlu0 %803
      %v805 = vsel %vm293, %v657, 0.0
      %806 = vadd.xlane.f32.xlu0 %v805
      %v807 = vpop.xlane.xlu0 %806
      %v808 = vsel %vm293, %v658, 0.0
      %809 = vadd.xlane.f32.xlu0 %v808
      %v810 = vpop.xlane.xlu0 %809
      %v811 = vsel %vm293, %v659, 0.0
      %812 = vadd.xlane.f32.xlu0 %v811
      %v813 = vpop.xlane.xlu0 %812
      %v814 = vsel %vm293, %v660, 0.0
      %815 = vadd.xlane.f32.xlu0 %v814
      %v816 = vpop.xlane.xlu0 %815
      %v817 = vsel %vm293, %v661, 0.0
      %818 = vadd.xlane.f32.xlu0 %v817
      %v819 = vpop.xlane.xlu0 %818
      %v820 = vsel %vm293, %v662, 0.0
      %821 = vadd.xlane.f32.xlu0 %v820
      %v822 = vpop.xlane.xlu0 %821
      %v823 = vsel %vm293, %v663, 0.0
      %824 = vadd.xlane.f32.xlu0 %v823
      %v825 = vpop.xlane.xlu0 %824
      %v826 = vsel %vm293, %v664, 0.0
      %827 = vadd.xlane.f32.xlu0 %v826
      %v828 = vpop.xlane.xlu0 %827
      %v829 = vsel %vm293, %v665, 0.0
      %830 = vadd.xlane.f32.xlu0 %v829
      %v831 = vpop.xlane.xlu0 %830
      %v832 = vsel %vm293, %v666, 0.0
      %833 = vadd.xlane.f32.xlu0 %v832
      %v834 = vpop.xlane.xlu0 %833
      %v835 = vsel %vm293, %v667, 0.0
      %836 = vadd.xlane.f32.xlu0 %v835
      %v837 = vpop.xlane.xlu0 %836
      %v838 = vsel %vm293, %v668, 0.0
      %839 = vadd.xlane.f32.xlu0 %v838
      %v840 = vpop.xlane.xlu0 %839
      %v841 = vsel %vm293, %v669, 0.0
      %842 = vadd.xlane.f32.xlu0 %v841
      %v843 = vpop.xlane.xlu0 %842
      %v844 = vsel %vm293, %v670, 0.0
      %845 = vadd.xlane.f32.xlu0 %v844
      %v846 = vpop.xlane.xlu0 %845
      %v847 = vsel %vm293, %v671, 0.0
      %848 = vadd.xlane.f32.xlu0 %v847
      %v849 = vpop.xlane.xlu0 %848
      %v850 = vsel %vm293, %v672, 0.0
      %851 = vadd.xlane.f32.xlu0 %v850
      %v852 = vpop.xlane.xlu0 %851
      %v853 = vsel %vm293, %v673, 0.0
      %854 = vadd.xlane.f32.xlu0 %v853
      %v855 = vpop.xlane.xlu0 %854
      %v856 = vsel %vm293, %v674, 0.0
      %857 = vadd.xlane.f32.xlu0 %v856
      %v858 = vpop.xlane.xlu0 %857
      %v859 = vsel %vm293, %v675, 0.0
      %860 = vadd.xlane.f32.xlu0 %v859
      %v861 = vpop.xlane.xlu0 %860
      %v862 = vsel %vm293, %v676, 0.0
      %863 = vadd.xlane.f32.xlu0 %v862
      %v864 = vpop.xlane.xlu0 %863
      %v865 = vsel %vm293, %v677, 0.0
      %866 = vadd.xlane.f32.xlu0 %v865
      %v867 = vpop.xlane.xlu0 %866
      %v868 = vsel %vm293, %v678, 0.0
      %869 = vadd.xlane.f32.xlu0 %v868
      %v870 = vpop.xlane.xlu0 %869
      %v871 = vmul.f32 %v681, %v486
      %v872 = vmul.f32 %v684, %v486
      %v873 = vmul.f32 %v687, %v486
      %v874 = vmul.f32 %v690, %v486
      %v875 = vmul.f32 %v693, %v486
      %v876 = vmul.f32 %v696, %v486
      %v877 = vmul.f32 %v699, %v486
      %v878 = vmul.f32 %v702, %v486
      %v879 = vmul.f32 %v705, %v486
      %v880 = vmul.f32 %v708, %v486
      %v881 = vmul.f32 %v711, %v486
      %v882 = vmul.f32 %v714, %v486
      %v883 = vmul.f32 %v717, %v486
      %v884 = vmul.f32 %v720, %v486
      %v885 = vmul.f32 %v723, %v486
      %v886 = vmul.f32 %v726, %v486
      %v887 = vmul.f32 %v729, %v486
      %v888 = vmul.f32 %v732, %v486
      %v889 = vmul.f32 %v735, %v486
      %v890 = vmul.f32 %v738, %v486
      %v891 = vmul.f32 %v741, %v486
      %v892 = vmul.f32 %v744, %v486
      %v893 = vmul.f32 %v747, %v486
      %v894 = vmul.f32 %v750, %v486
      %v895 = vmul.f32 %v753, %v486
      %v896 = vmul.f32 %v756, %v486
      %v897 = vmul.f32 %v759, %v486
      %v898 = vmul.f32 %v762, %v486
      %v899 = vmul.f32 %v765, %v486
      %v900 = vmul.f32 %v768, %v486
      %v901 = vmul.f32 %v771, %v486
      %v902 = vmul.f32 %v774, %v486
      %v903 = vmul.f32 %v777, %v486
      %v904 = vmul.f32 %v780, %v486
      %v905 = vmul.f32 %v783, %v486
      %v906 = vmul.f32 %v786, %v486
      %v907 = vmul.f32 %v789, %v486
      %v908 = vmul.f32 %v792, %v486
      %v909 = vmul.f32 %v795, %v486
      %v910 = vmul.f32 %v798, %v486
      %v911 = vmul.f32 %v801, %v486
      %v912 = vmul.f32 %v804, %v486
      %v913 = vmul.f32 %v807, %v486
      %v914 = vmul.f32 %v810, %v486
      %v915 = vmul.f32 %v813, %v486
      %v916 = vmul.f32 %v816, %v486
      %v917 = vmul.f32 %v819, %v486
      %v918 = vmul.f32 %v822, %v486
      %v919 = vmul.f32 %v825, %v486
      %v920 = vmul.f32 %v828, %v486
      %v921 = vmul.f32 %v831, %v486
      %v922 = vmul.f32 %v834, %v486
      %v923 = vmul.f32 %v837, %v486
      %v924 = vmul.f32 %v840, %v486
      %v925 = vmul.f32 %v843, %v486
      %v926 = vmul.f32 %v846, %v486
      %v927 = vmul.f32 %v849, %v486
      %v928 = vmul.f32 %v852, %v486
      %v929 = vmul.f32 %v855, %v486
      %v930 = vmul.f32 %v858, %v486
      %v931 = vmul.f32 %v861, %v486
      %v932 = vmul.f32 %v864, %v486
      %v933 = vmul.f32 %v867, %v486
      %v934 = vmul.f32 %v870, %v486
      %v935 = vadd.f32 %v871, 1e-05
      %v936 = vadd.f32 %v872, 1e-05
      %v937 = vadd.f32 %v873, 1e-05
      %v938 = vadd.f32 %v874, 1e-05
      %v939 = vadd.f32 %v875, 1e-05
      %v940 = vadd.f32 %v876, 1e-05
      %v941 = vadd.f32 %v877, 1e-05
      %v942 = vadd.f32 %v878, 1e-05
      %v943 = vadd.f32 %v879, 1e-05
      %v944 = vadd.f32 %v880, 1e-05
      %v945 = vadd.f32 %v881, 1e-05
      %v946 = vadd.f32 %v882, 1e-05
      %v947 = vadd.f32 %v883, 1e-05
      %v948 = vadd.f32 %v884, 1e-05
      %v949 = vadd.f32 %v885, 1e-05
      %v950 = vadd.f32 %v886, 1e-05
      %v951 = vadd.f32 %v887, 1e-05
      %v952 = vadd.f32 %v888, 1e-05
      %v953 = vadd.f32 %v889, 1e-05
      %v954 = vadd.f32 %v890, 1e-05
      %v955 = vadd.f32 %v891, 1e-05
      %v956 = vadd.f32 %v892, 1e-05
      %v957 = vadd.f32 %v893, 1e-05
      %v958 = vadd.f32 %v894, 1e-05
      %v959 = vadd.f32 %v895, 1e-05
      %v960 = vadd.f32 %v896, 1e-05
      %v961 = vadd.f32 %v897, 1e-05
      %v962 = vadd.f32 %v898, 1e-05
      %v963 = vadd.f32 %v899, 1e-05
      %v964 = vadd.f32 %v900, 1e-05
      %v965 = vadd.f32 %v901, 1e-05
      %v966 = vadd.f32 %v902, 1e-05
      %v967 = vadd.f32 %v903, 1e-05
      %v968 = vadd.f32 %v904, 1e-05
      %v969 = vadd.f32 %v905, 1e-05
      %v970 = vadd.f32 %v906, 1e-05
      %v971 = vadd.f32 %v907, 1e-05
      %v972 = vadd.f32 %v908, 1e-05
      %v973 = vadd.f32 %v909, 1e-05
      %v974 = vadd.f32 %v910, 1e-05
      %v975 = vadd.f32 %v911, 1e-05
      %v976 = vadd.f32 %v912, 1e-05
      %v977 = vadd.f32 %v913, 1e-05
      %v978 = vadd.f32 %v914, 1e-05
      %v979 = vadd.f32 %v915, 1e-05
      %v980 = vadd.f32 %v916, 1e-05
      %v981 = vadd.f32 %v917, 1e-05
      %v982 = vadd.f32 %v918, 1e-05
      %v983 = vadd.f32 %v919, 1e-05
      %v984 = vadd.f32 %v920, 1e-05
      %v985 = vadd.f32 %v921, 1e-05
      %v986 = vadd.f32 %v922, 1e-05
      %v987 = vadd.f32 %v923, 1e-05
      %v988 = vadd.f32 %v924, 1e-05
      %v989 = vadd.f32 %v925, 1e-05
      %v990 = vadd.f32 %v926, 1e-05
      %v991 = vadd.f32 %v927, 1e-05
      %v992 = vadd.f32 %v928, 1e-05
      %v993 = vadd.f32 %v929, 1e-05
      %v994 = vadd.f32 %v930, 1e-05
      %v995 = vadd.f32 %v931, 1e-05
      %v996 = vadd.f32 %v932, 1e-05
      %v997 = vadd.f32 %v933, 1e-05
      %v998 = vadd.f32 %v934, 1e-05
      %v999 = vrsqrt.pop %v935
      %v1000 = vrsqrt.pop %v936
      %v1001 = vrsqrt.pop %v937
      %v1002 = vrsqrt.pop %v938
      %v1003 = vrsqrt.pop %v939
      %v1004 = vrsqrt.pop %v940
      %v1005 = vrsqrt.pop %v941
      %v1006 = vrsqrt.pop %v942
      %v1007 = vrsqrt.pop %v943
      %v1008 = vrsqrt.pop %v944
      %v1009 = vrsqrt.pop %v945
      %v1010 = vrsqrt.pop %v946
      %v1011 = vrsqrt.pop %v947
      %v1012 = vrsqrt.pop %v948
      %v1013 = vrsqrt.pop %v949
      %v1014 = vrsqrt.pop %v950
      %v1015 = vrsqrt.pop %v951
      %v1016 = vrsqrt.pop %v952
      %v1017 = vrsqrt.pop %v953
      %v1018 = vrsqrt.pop %v954
      %v1019 = vrsqrt.pop %v955
      %v1020 = vrsqrt.pop %v956
      %v1021 = vrsqrt.pop %v957
      %v1022 = vrsqrt.pop %v958
      %v1023 = vrsqrt.pop %v959
      %v1024 = vrsqrt.pop %v960
      %v1025 = vrsqrt.pop %v961
      %v1026 = vrsqrt.pop %v962
      %v1027 = vrsqrt.pop %v963
      %v1028 = vrsqrt.pop %v964
      %v1029 = vrsqrt.pop %v965
      %v1030 = vrsqrt.pop %v966
      %v1031 = vrsqrt.pop %v967
      %v1032 = vrsqrt.pop %v968
      %v1033 = vrsqrt.pop %v969
      %v1034 = vrsqrt.pop %v970
      %v1035 = vrsqrt.pop %v971
      %v1036 = vrsqrt.pop %v972
      %v1037 = vrsqrt.pop %v973
      %v1038 = vrsqrt.pop %v974
      %v1039 = vrsqrt.pop %v975
      %v1040 = vrsqrt.pop %v976
      %v1041 = vrsqrt.pop %v977
      %v1042 = vrsqrt.pop %v978
      %v1043 = vrsqrt.pop %v979
      %v1044 = vrsqrt.pop %v980
      %v1045 = vrsqrt.pop %v981
      %v1046 = vrsqrt.pop %v982
      %v1047 = vrsqrt.pop %v983
      %v1048 = vrsqrt.pop %v984
      %v1049 = vrsqrt.pop %v985
      %v1050 = vrsqrt.pop %v986
      %v1051 = vrsqrt.pop %v987
      %v1052 = vrsqrt.pop %v988
      %v1053 = vrsqrt.pop %v989
      %v1054 = vrsqrt.pop %v990
      %v1055 = vrsqrt.pop %v991
      %v1056 = vrsqrt.pop %v992
      %v1057 = vrsqrt.pop %v993
      %v1058 = vrsqrt.pop %v994
      %v1059 = vrsqrt.pop %v995
      %v1060 = vrsqrt.pop %v996
      %v1061 = vrsqrt.pop %v997
      %v1062 = vrsqrt.pop %v998
      %v1063 = vmul.f32 %v551, %v999
      %v1064 = vmul.f32 %v552, %v1000
      %v1065 = vmul.f32 %v553, %v1001
      %v1066 = vmul.f32 %v554, %v1002
      %v1067 = vmul.f32 %v555, %v1003
      %v1068 = vmul.f32 %v556, %v1004
      %v1069 = vmul.f32 %v557, %v1005
      %v1070 = vmul.f32 %v558, %v1006
      %v1071 = vmul.f32 %v559, %v1007
      %v1072 = vmul.f32 %v560, %v1008
      %v1073 = vmul.f32 %v561, %v1009
      %v1074 = vmul.f32 %v562, %v1010
      %v1075 = vmul.f32 %v563, %v1011
      %v1076 = vmul.f32 %v564, %v1012
      %v1077 = vmul.f32 %v565, %v1013
      %v1078 = vmul.f32 %v566, %v1014
      %v1079 = vmul.f32 %v567, %v1015
      %v1080 = vmul.f32 %v568, %v1016
      %v1081 = vmul.f32 %v569, %v1017
      %v1082 = vmul.f32 %v570, %v1018
      %v1083 = vmul.f32 %v571, %v1019
      %v1084 = vmul.f32 %v572, %v1020
      %v1085 = vmul.f32 %v573, %v1021
      %v1086 = vmul.f32 %v574, %v1022
      %v1087 = vmul.f32 %v575, %v1023
      %v1088 = vmul.f32 %v576, %v1024
      %v1089 = vmul.f32 %v577, %v1025
      %v1090 = vmul.f32 %v578, %v1026
      %v1091 = vmul.f32 %v579, %v1027
      %v1092 = vmul.f32 %v580, %v1028
      %v1093 = vmul.f32 %v581, %v1029
      %v1094 = vmul.f32 %v582, %v1030
      %v1095 = vmul.f32 %v583, %v1031
      %v1096 = vmul.f32 %v584, %v1032
      %v1097 = vmul.f32 %v585, %v1033
      %v1098 = vmul.f32 %v586, %v1034
      %v1099 = vmul.f32 %v587, %v1035
      %v1100 = vmul.f32 %v588, %v1036
      %v1101 = vmul.f32 %v589, %v1037
      %v1102 = vmul.f32 %v590, %v1038
      %v1103 = vmul.f32 %v591, %v1039
      %v1104 = vmul.f32 %v592, %v1040
      %v1105 = vmul.f32 %v593, %v1041
      %v1106 = vmul.f32 %v594, %v1042
      %v1107 = vmul.f32 %v595, %v1043
      %v1108 = vmul.f32 %v596, %v1044
      %v1109 = vmul.f32 %v597, %v1045
      %v1110 = vmul.f32 %v598, %v1046
      %v1111 = vmul.f32 %v599, %v1047
      %v1112 = vmul.f32 %v600, %v1048
      %v1113 = vmul.f32 %v601, %v1049
      %v1114 = vmul.f32 %v602, %v1050
      %v1115 = vmul.f32 %v603, %v1051
      %v1116 = vmul.f32 %v604, %v1052
      %v1117 = vmul.f32 %v605, %v1053
      %v1118 = vmul.f32 %v606, %v1054
      %v1119 = vmul.f32 %v607, %v1055
      %v1120 = vmul.f32 %v608, %v1056
      %v1121 = vmul.f32 %v609, %v1057
      %v1122 = vmul.f32 %v610, %v1058
      %v1123 = vmul.f32 %v611, %v1059
      %v1124 = vmul.f32 %v612, %v1060
      %v1125 = vmul.f32 %v613, %v1061
      %v1126 = vmul.f32 %v614, %v1062
      %v1127 = vpack.c.bf16 %v1064, %v1063
      %v1128 = vpack.c.bf16 %v1066, %v1065
      %v1129 = vpack.c.bf16 %v1068, %v1067
      %v1130 = vpack.c.bf16 %v1070, %v1069
      %v1131 = vpack.c.bf16 %v1072, %v1071
      %v1132 = vpack.c.bf16 %v1074, %v1073
      %v1133 = vpack.c.bf16 %v1076, %v1075
      %v1134 = vpack.c.bf16 %v1078, %v1077
      %v1135 = vpack.c.bf16 %v1080, %v1079
      %v1136 = vpack.c.bf16 %v1082, %v1081
      %v1137 = vpack.c.bf16 %v1084, %v1083
      %v1138 = vpack.c.bf16 %v1086, %v1085
      %v1139 = vpack.c.bf16 %v1088, %v1087
      %v1140 = vpack.c.bf16 %v1090, %v1089
      %v1141 = vpack.c.bf16 %v1092, %v1091
      %v1142 = vpack.c.bf16 %v1094, %v1093
      %v1143 = vpack.c.bf16 %v1096, %v1095
      %v1144 = vpack.c.bf16 %v1098, %v1097
      %v1145 = vpack.c.bf16 %v1100, %v1099
      %v1146 = vpack.c.bf16 %v1102, %v1101
      %v1147 = vpack.c.bf16 %v1104, %v1103
      %v1148 = vpack.c.bf16 %v1106, %v1105
      %v1149 = vpack.c.bf16 %v1108, %v1107
      %v1150 = vpack.c.bf16 %v1110, %v1109
      %v1151 = vpack.c.bf16 %v1112, %v1111
      %v1152 = vpack.c.bf16 %v1114, %v1113
      %v1153 = vpack.c.bf16 %v1116, %v1115
      %v1154 = vpack.c.bf16 %v1118, %v1117
      %v1155 = vpack.c.bf16 %v1120, %v1119
      %v1156 = vpack.c.bf16 %v1122, %v1121
      %v1157 = vpack.c.bf16 %v1124, %v1123
      %v1158 = vpack.c.bf16 %v1126, %v1125
      %v1159 = vld [vmem:[%s1] sm:$0xff]
      %v1160 = vld [vmem:[%s1 + $0x8] sm:$0xff]
      %v1161 = vld [vmem:[%s1 + $0x10] sm:$0xff]
      %v1162 = vld [vmem:[%s1 + $0x18] sm:$0xff]
      %v1163 = vld [vmem:[%s1 + $0x20] sm:$0xff]
      %v1164 = vld [vmem:[%s1 + $0x28] sm:$0xff]
      %v1165 = vld [vmem:[%s1 + $0x30] sm:$0xff]
      %v1166 = vld [vmem:[%s1 + $0x38] sm:$0xff]
      %v1167 = vld [vmem:[%s1 + $0x40] sm:$0xff]
      %v1168 = vld [vmem:[%s1 + $0x48] sm:$0xff]
      %v1169 = vld [vmem:[%s1 + $0x50] sm:$0xff]
      %v1170 = vld [vmem:[%s1 + $0x58] sm:$0xff]
      %v1171 = vld [vmem:[%s2] sm:$0x3]
      %v1173 = vlaneseq
      %v1174 = vshrl.u32 %v1173, 7
      %v1175 = vsub.s32 0, %v1174
      %v1176 = vrot.slane %v1171, %v1175
      %v1177 = vlaneseq
      %v1178 = vshrl.u32 %v1177, 7
      %v1179 = vsub.s32 1, %v1178
      %v1180 = vrot.slane %v1171, %v1179
      %v1195 = vunpack.c.l.b16 %v1159
      %v1196 = vunpack.c.h.b16 %v1159
      %v1197 = vunpack.c.l.b16 %v1160
      %v1198 = vunpack.c.h.b16 %v1160
      %v1199 = vunpack.c.l.b16 %v1161
      %v1200 = vunpack.c.h.b16 %v1161
      %v1201 = vunpack.c.l.b16 %v1162
      %v1202 = vunpack.c.h.b16 %v1162
      %v1203 = vunpack.c.l.b16 %v1163
      %v1204 = vunpack.c.h.b16 %v1163
      %v1205 = vunpack.c.l.b16 %v1164
      %v1206 = vunpack.c.h.b16 %v1164
      %v1207 = vunpack.c.l.b16 %v1165
      %v1208 = vunpack.c.h.b16 %v1165
      %v1209 = vunpack.c.l.b16 %v1166
      %v1210 = vunpack.c.h.b16 %v1166
      %v1211 = vunpack.c.l.b16 %v1167
      %v1212 = vunpack.c.h.b16 %v1167
      %v1213 = vunpack.c.l.b16 %v1168
      %v1214 = vunpack.c.h.b16 %v1168
      %v1215 = vunpack.c.l.b16 %v1169
      %v1216 = vunpack.c.h.b16 %v1169
      %v1217 = vunpack.c.l.b16 %v1170
      %v1218 = vunpack.c.h.b16 %v1170
      %v1219 = vpack.c.b16 %v1197, %v1195
      %v1220 = vpack.c.b16 %v1198, %v1196
      %v1221 = vpack.c.b16 %v1201, %v1199
      %v1222 = vpack.c.b16 %v1202, %v1200
      %v1223 = vpack.c.b16 %v1205, %v1203
      %v1224 = vpack.c.b16 %v1206, %v1204
      %v1225 = vpack.c.b16 %v1209, %v1207
      %v1226 = vpack.c.b16 %v1210, %v1208
      %v1227 = vpack.c.b16 %v1213, %v1211
      %v1228 = vpack.c.b16 %v1214, %v1212
      %v1229 = vpack.c.b16 %v1217, %v1215
      %v1230 = vpack.c.b16 %v1218, %v1216
      %v1244 = vsel %vm293, %v1127, 0
      %v1247 = vsel %vm293, %v1128, 0
      %v1250 = vsel %vm293, %v1129, 0
      %v1253 = vsel %vm293, %v1130, 0
      %v1256 = vsel %vm293, %v1131, 0
      %v1259 = vsel %vm293, %v1132, 0
      %v1262 = vsel %vm293, %v1133, 0
      %v1265 = vsel %vm293, %v1134, 0
      %v1268 = vsel %vm293, %v1135, 0
      %v1271 = vsel %vm293, %v1136, 0
      %v1274 = vsel %vm293, %v1137, 0
      %v1277 = vsel %vm293, %v1138, 0
      %v1280 = vsel %vm293, %v1139, 0
      %v1283 = vsel %vm293, %v1140, 0
      %v1286 = vsel %vm293, %v1141, 0
      %v1289 = vsel %vm293, %v1142, 0
      %v1292 = vsel %vm293, %v1143, 0
      %v1295 = vsel %vm293, %v1144, 0
      %v1298 = vsel %vm293, %v1145, 0
      %v1301 = vsel %vm293, %v1146, 0
      %v1304 = vsel %vm293, %v1147, 0
      %v1307 = vsel %vm293, %v1148, 0
      %v1310 = vsel %vm293, %v1149, 0
      %v1313 = vsel %vm293, %v1150, 0
      %v1316 = vsel %vm293, %v1151, 0
      %v1319 = vsel %vm293, %v1152, 0
      %v1322 = vsel %vm293, %v1153, 0
      %v1325 = vsel %vm293, %v1154, 0
      %v1328 = vsel %vm293, %v1155, 0
      %v1331 = vsel %vm293, %v1156, 0
      %v1334 = vsel %vm293, %v1157, 0
      %v1337 = vsel %vm293, %v1158, 0
      %1339 = vmatprep.subr.bf16.mxu0 %v1220
      %1340 = vmatpush1.bf16.msra.mxu0 %v1219
      %1341 = vmatprep.subr.bf16.mxu0 %v1222
      %1342 = vmatpush1.bf16.msra.mxu0 %v1221
      %1343 = vmatprep.subr.bf16.mxu0 %v1224
      %1344 = vmatpush1.bf16.msra.mxu0 %v1223
      %1345 = vmatprep.subr.bf16.mxu0 %v1226
      %1346 = vmatpush1.bf16.msra.mxu0 %v1225
      %1347 = vmatprep.subr.bf16.mxu0 %v1228
      %1348 = vmatpush1.bf16.msra.mxu0 %v1227
      %1349 = vmatprep.subr.bf16.mxu0 %v1230
      %1350 = vmatpush1.bf16.msra.mxu0 %v1229
      %1351 = vmatprep.subr.bf16.mxu0 0
      %1352 = vmatpush1.bf16.msra.mxu0 0
      %1353 = vmatprep.subr.bf16.mxu0 0
      %1354 = vmatpush1.bf16.msra.mxu0 0
      %1355 = vmatprep.subr.bf16.mxu0 0
      %1356 = vmatpush1.bf16.msra.mxu0 0
      %1357 = vmatprep.subr.bf16.mxu0 0
      %1358 = vmatpush1.bf16.msra.mxu0 0
      %1359 = vmatprep.subr.bf16.mxu0 0
      %1360 = vmatpush1.bf16.msra.mxu0 0
      %1361 = vmatprep.subr.bf16.mxu0 0
      %1362 = vmatpush1.bf16.msra.mxu0 0
      %1363 = vmatprep.subr.bf16.mxu0 0
      %1364 = vmatpush1.bf16.msra.mxu0 0
      %1365 = vmatprep.subr.bf16.mxu0 0
      %1366 = vmatpush1.bf16.msra.mxu0 0
      %1367 = vmatprep.subr.bf16.mxu0 0
      %1368 = vmatpush1.bf16.msra.mxu0 0
      %1369 = vmatprep.subr.bf16.mxu0 0
      %1370 = vmatpush1.bf16.msra.mxu0 0
      %1371 = vmatprep.mubr.bf16.mxu0 0
      %1372 = vmatmul.mubr.bf16.gmra.mrb[0].mxu0 %v1244
      %v1373 = vpop.f32.mrb[0].mxu0
      %v1374 = vadd.f32 %v1176, %v1373
      %v1375 = vpop.f32.mrb[0].mxu0
      %v1376 = vadd.f32 %v1180, %v1375
      %v1377 = vpop.f32.mrb[0].mxu0
      %v1378 = vadd.f32 %v1176, %v1377
      %v1379 = vpop.f32.mrb[0].mxu0
      %v1380 = vadd.f32 %v1180, %v1379
      %1381 = vmatprep.mubr.bf16.mxu0 0
      %1382 = vmatmul.mubr.bf16.gmra.mrb[0].mxu0 %v1247
      %v1383 = vpop.f32.mrb[0].mxu0
      %v1384 = vadd.f32 %v1176, %v1383
      %v1385 = vpop.f32.mrb[0].mxu0
      %v1386 = vadd.f32 %v1180, %v1385
      %v1387 = vpop.f32.mrb[0].mxu0
      %v1388 = vadd.f32 %v1176, %v1387
      %v1389 = vpop.f32.mrb[0].mxu0
      %v1390 = vadd.f32 %v1180, %v1389
      %1391 = vmatprep.mubr.bf16.mxu0 0
      %1392 = vmatmul.mubr.bf16.gmra.mrb[0].mxu0 %v1250
      %v1393 = vpop.f32.mrb[0].mxu0
      %v1394 = vadd.f32 %v1176, %v1393
      %v1395 = vpop.f32.mrb[0].mxu0
      %v1396 = vadd.f32 %v1180, %v1395
      %v1397 = vpop.f32.mrb[0].mxu0
      %v1398 = vadd.f32 %v1176, %v1397
      %v1399 = vpop.f32.mrb[0].mxu0
      %v1400 = vadd.f32 %v1180, %v1399
      %1401 = vmatprep.mubr.bf16.mxu0 0
      %1402 = vmatmul.mubr.bf16.gmra.mrb[0].mxu0 %v1253
      %v1403 = vpop.f32.mrb[0].mxu0
      %v1404 = vadd.f32 %v1176, %v1403
      %v1405 = vpop.f32.mrb[0].mxu0
      %v1406 = vadd.f32 %v1180, %v1405
      %v1407 = vpop.f32.mrb[0].mxu0
      %v1408 = vadd.f32 %v1176, %v1407
      %v1409 = vpop.f32.mrb[0].mxu0
      %v1410 = vadd.f32 %v1180, %v1409
      %1411 = vmatprep.mubr.bf16.mxu0 0
      %1412 = vmatmul.mubr.bf16.gmra.mrb[0].mxu0 %v1256
      %v1413 = vpop.f32.mrb[0].mxu0
      %v1414 = vadd.f32 %v1176, %v1413
      %v1415 = vpop.f32.mrb[0].mxu0
      %v1416 = vadd.f32 %v1180, %v1415
      %v1417 = vpop.f32.mrb[0].mxu0
      %v1418 = vadd.f32 %v1176, %v1417
      %v1419 = vpop.f32.mrb[0].mxu0
      %v1420 = vadd.f32 %v1180, %v1419
      %1421 = vmatprep.mubr.bf16.mxu0 0
      %1422 = vmatmul.mubr.bf16.gmra.mrb[0].mxu0 %v1259
      %v1423 = vpop.f32.mrb[0].mxu0
      %v1424 = vadd.f32 %v1176, %v1423
      %v1425 = vpop.f32.mrb[0].mxu0
      %v1426 = vadd.f32 %v1180, %v1425
      %v1427 = vpop.f32.mrb[0].mxu0
      %v1428 = vadd.f32 %v1176, %v1427
      %v1429 = vpop.f32.mrb[0].mxu0
      %v1430 = vadd.f32 %v1180, %v1429
      %1431 = vmatprep.mubr.bf16.mxu0 0
      %1432 = vmatmul.mubr.bf16.gmra.mrb[0].mxu0 %v1262
      %v1433 = vpop.f32.mrb[0].mxu0
      %v1434 = vadd.f32 %v1176, %v1433
      %v1435 = vpop.f32.mrb[0].mxu0
      %v1436 = vadd.f32 %v1180, %v1435
      %v1437 = vpop.f32.mrb[0].mxu0
      %v1438 = vadd.f32 %v1176, %v1437
      %v1439 = vpop.f32.mrb[0].mxu0
      %v1440 = vadd.f32 %v1180, %v1439
      %1441 = vmatprep.mubr.bf16.mxu0 0
      %1442 = vmatmul.mubr.bf16.gmra.mrb[0].mxu0 %v1265
      %v1443 = vpop.f32.mrb[0].mxu0
      %v1444 = vadd.f32 %v1176, %v1443
      %v1445 = vpop.f32.mrb[0].mxu0
      %v1446 = vadd.f32 %v1180, %v1445
      %v1447 = vpop.f32.mrb[0].mxu0
      %v1448 = vadd.f32 %v1176, %v1447
      %v1449 = vpop.f32.mrb[0].mxu0
      %v1450 = vadd.f32 %v1180, %v1449
      %1451 = vmatprep.mubr.bf16.mxu0 0
      %1452 = vmatmul.mubr.bf16.gmra.mrb[0].mxu0 %v1268
      %v1453 = vpop.f32.mrb[0].mxu0
      %v1454 = vadd.f32 %v1176, %v1453
      %v1455 = vpop.f32.mrb[0].mxu0
      %v1456 = vadd.f32 %v1180, %v1455
      %v1457 = vpop.f32.mrb[0].mxu0
      %v1458 = vadd.f32 %v1176, %v1457
      %v1459 = vpop.f32.mrb[0].mxu0
      %v1460 = vadd.f32 %v1180, %v1459
      %1461 = vmatprep.mubr.bf16.mxu0 0
      %1462 = vmatmul.mubr.bf16.gmra.mrb[0].mxu0 %v1271
      %v1463 = vpop.f32.mrb[0].mxu0
      %v1464 = vadd.f32 %v1176, %v1463
      %v1465 = vpop.f32.mrb[0].mxu0
      %v1466 = vadd.f32 %v1180, %v1465
      %v1467 = vpop.f32.mrb[0].mxu0
      %v1468 = vadd.f32 %v1176, %v1467
      %v1469 = vpop.f32.mrb[0].mxu0
      %v1470 = vadd.f32 %v1180, %v1469
      %1471 = vmatprep.mubr.bf16.mxu0 0
      %1472 = vmatmul.mubr.bf16.gmra.mrb[0].mxu0 %v1274
      %v1473 = vpop.f32.mrb[0].mxu0
      %v1474 = vadd.f32 %v1176, %v1473
      %v1475 = vpop.f32.mrb[0].mxu0
      %v1476 = vadd.f32 %v1180, %v1475
      %v1477 = vpop.f32.mrb[0].mxu0
      %v1478 = vadd.f32 %v1176, %v1477
      %v1479 = vpop.f32.mrb[0].mxu0
      %v1480 = vadd.f32 %v1180, %v1479
      %1481 = vmatprep.mubr.bf16.mxu0 0
      %1482 = vmatmul.mubr.bf16.gmra.mrb[0].mxu0 %v1277
      %v1483 = vpop.f32.mrb[0].mxu0
      %v1484 = vadd.f32 %v1176, %v1483
      %v1485 = vpop.f32.mrb[0].mxu0
      %v1486 = vadd.f32 %v1180, %v1485
      %v1487 = vpop.f32.mrb[0].mxu0
      %v1488 = vadd.f32 %v1176, %v1487
      %v1489 = vpop.f32.mrb[0].mxu0
      %v1490 = vadd.f32 %v1180, %v1489
      %1491 = vmatprep.mubr.bf16.mxu0 0
      %1492 = vmatmul.mubr.bf16.gmra.mrb[0].mxu0 %v1280
      %v1493 = vpop.f32.mrb[0].mxu0
      %v1494 = vadd.f32 %v1176, %v1493
      %v1495 = vpop.f32.mrb[0].mxu0
      %v1496 = vadd.f32 %v1180, %v1495
      %v1497 = vpop.f32.mrb[0].mxu0
      %v1498 = vadd.f32 %v1176, %v1497
      %v1499 = vpop.f32.mrb[0].mxu0
      %v1500 = vadd.f32 %v1180, %v1499
      %1501 = vmatprep.mubr.bf16.mxu0 0
      %1502 = vmatmul.mubr.bf16.gmra.mrb[0].mxu0 %v1283
      %v1503 = vpop.f32.mrb[0].mxu0
      %v1504 = vadd.f32 %v1176, %v1503
      %v1505 = vpop.f32.mrb[0].mxu0
      %v1506 = vadd.f32 %v1180, %v1505
      %v1507 = vpop.f32.mrb[0].mxu0
      %v1508 = vadd.f32 %v1176, %v1507
      %v1509 = vpop.f32.mrb[0].mxu0
      %v1510 = vadd.f32 %v1180, %v1509
      %1511 = vmatprep.mubr.bf16.mxu0 0
      %1512 = vmatmul.mubr.bf16.gmra.mrb[0].mxu0 %v1286
      %v1513 = vpop.f32.mrb[0].mxu0
      %v1514 = vadd.f32 %v1176, %v1513
      %v1515 = vpop.f32.mrb[0].mxu0
      %v1516 = vadd.f32 %v1180, %v1515
      %v1517 = vpop.f32.mrb[0].mxu0
      %v1518 = vadd.f32 %v1176, %v1517
      %v1519 = vpop.f32.mrb[0].mxu0
      %v1520 = vadd.f32 %v1180, %v1519
      %1521 = vmatprep.mubr.bf16.mxu0 0
      %1522 = vmatmul.mubr.bf16.gmra.mrb[0].mxu0 %v1289
      %v1523 = vpop.f32.mrb[0].mxu0
      %v1524 = vadd.f32 %v1176, %v1523
      %v1525 = vpop.f32.mrb[0].mxu0
      %v1526 = vadd.f32 %v1180, %v1525
      %v1527 = vpop.f32.mrb[0].mxu0
      %v1528 = vadd.f32 %v1176, %v1527
      %v1529 = vpop.f32.mrb[0].mxu0
      %v1530 = vadd.f32 %v1180, %v1529
      %1531 = vmatprep.mubr.bf16.mxu0 0
      %1532 = vmatmul.mubr.bf16.gmra.mrb[0].mxu0 %v1292
      %v1533 = vpop.f32.mrb[0].mxu0
      %v1534 = vadd.f32 %v1176, %v1533
      %v1535 = vpop.f32.mrb[0].mxu0
      %v1536 = vadd.f32 %v1180, %v1535
      %v1537 = vpop.f32.mrb[0].mxu0
      %v1538 = vadd.f32 %v1176, %v1537
      %v1539 = vpop.f32.mrb[0].mxu0
      %v1540 = vadd.f32 %v1180, %v1539
      %1541 = vmatprep.mubr.bf16.mxu0 0
      %1542 = vmatmul.mubr.bf16.gmra.mrb[0].mxu0 %v1295
      %v1543 = vpop.f32.mrb[0].mxu0
      %v1544 = vadd.f32 %v1176, %v1543
      %v1545 = vpop.f32.mrb[0].mxu0
      %v1546 = vadd.f32 %v1180, %v1545
      %v1547 = vpop.f32.mrb[0].mxu0
      %v1548 = vadd.f32 %v1176, %v1547
      %v1549 = vpop.f32.mrb[0].mxu0
      %v1550 = vadd.f32 %v1180, %v1549
      %1551 = vmatprep.mubr.bf16.mxu0 0
      %1552 = vmatmul.mubr.bf16.gmra.mrb[0].mxu0 %v1298
      %v1553 = vpop.f32.mrb[0].mxu0
      %v1554 = vadd.f32 %v1176, %v1553
      %v1555 = vpop.f32.mrb[0].mxu0
      %v1556 = vadd.f32 %v1180, %v1555
      %v1557 = vpop.f32.mrb[0].mxu0
      %v1558 = vadd.f32 %v1176, %v1557
      %v1559 = vpop.f32.mrb[0].mxu0
      %v1560 = vadd.f32 %v1180, %v1559
      %1561 = vmatprep.mubr.bf16.mxu0 0
      %1562 = vmatmul.mubr.bf16.gmra.mrb[0].mxu0 %v1301
      %v1563 = vpop.f32.mrb[0].mxu0
      %v1564 = vadd.f32 %v1176, %v1563
      %v1565 = vpop.f32.mrb[0].mxu0
      %v1566 = vadd.f32 %v1180, %v1565
      %v1567 = vpop.f32.mrb[0].mxu0
      %v1568 = vadd.f32 %v1176, %v1567
      %v1569 = vpop.f32.mrb[0].mxu0
      %v1570 = vadd.f32 %v1180, %v1569
      %1571 = vmatprep.mubr.bf16.mxu0 0
      %1572 = vmatmul.mubr.bf16.gmra.mrb[0].mxu0 %v1304
      %v1573 = vpop.f32.mrb[0].mxu0
      %v1574 = vadd.f32 %v1176, %v1573
      %v1575 = vpop.f32.mrb[0].mxu0
      %v1576 = vadd.f32 %v1180, %v1575
      %v1577 = vpop.f32.mrb[0].mxu0
      %v1578 = vadd.f32 %v1176, %v1577
      %v1579 = vpop.f32.mrb[0].mxu0
      %v1580 = vadd.f32 %v1180, %v1579
      %1581 = vmatprep.mubr.bf16.mxu0 0
      %1582 = vmatmul.mubr.bf16.gmra.mrb[0].mxu0 %v1307
      %v1583 = vpop.f32.mrb[0].mxu0
      %v1584 = vadd.f32 %v1176, %v1583
      %v1585 = vpop.f32.mrb[0].mxu0
      %v1586 = vadd.f32 %v1180, %v1585
      %v1587 = vpop.f32.mrb[0].mxu0
      %v1588 = vadd.f32 %v1176, %v1587
      %v1589 = vpop.f32.mrb[0].mxu0
      %v1590 = vadd.f32 %v1180, %v1589
      %1591 = vmatprep.mubr.bf16.mxu0 0
      %1592 = vmatmul.mubr.bf16.gmra.mrb[0].mxu0 %v1310
      %v1593 = vpop.f32.mrb[0].mxu0
      %v1594 = vadd.f32 %v1176, %v1593
      %v1595 = vpop.f32.mrb[0].mxu0
      %v1596 = vadd.f32 %v1180, %v1595
      %v1597 = vpop.f32.mrb[0].mxu0
      %v1598 = vadd.f32 %v1176, %v1597
      %v1599 = vpop.f32.mrb[0].mxu0
      %v1600 = vadd.f32 %v1180, %v1599
      %1601 = vmatprep.mubr.bf16.mxu0 0
      %1602 = vmatmul.mubr.bf16.gmra.mrb[0].mxu0 %v1313
      %v1603 = vpop.f32.mrb[0].mxu0
      %v1604 = vadd.f32 %v1176, %v1603
      %v1605 = vpop.f32.mrb[0].mxu0
      %v1606 = vadd.f32 %v1180, %v1605
      %v1607 = vpop.f32.mrb[0].mxu0
      %v1608 = vadd.f32 %v1176, %v1607
      %v1609 = vpop.f32.mrb[0].mxu0
      %v1610 = vadd.f32 %v1180, %v1609
      %1611 = vmatprep.mubr.bf16.mxu0 0
      %1612 = vmatmul.mubr.bf16.gmra.mrb[0].mxu0 %v1316
      %v1613 = vpop.f32.mrb[0].mxu0
      %v1614 = vadd.f32 %v1176, %v1613
      %v1615 = vpop.f32.mrb[0].mxu0
      %v1616 = vadd.f32 %v1180, %v1615
      %v1617 = vpop.f32.mrb[0].mxu0
      %v1618 = vadd.f32 %v1176, %v1617
      %v1619 = vpop.f32.mrb[0].mxu0
      %v1620 = vadd.f32 %v1180, %v1619
      %1621 = vmatprep.mubr.bf16.mxu0 0
      %1622 = vmatmul.mubr.bf16.gmra.mrb[0].mxu0 %v1319
      %v1623 = vpop.f32.mrb[0].mxu0
      %v1624 = vadd.f32 %v1176, %v1623
      %v1625 = vpop.f32.mrb[0].mxu0
      %v1626 = vadd.f32 %v1180, %v1625
      %v1627 = vpop.f32.mrb[0].mxu0
      %v1628 = vadd.f32 %v1176, %v1627
      %v1629 = vpop.f32.mrb[0].mxu0
      %v1630 = vadd.f32 %v1180, %v1629
      %1631 = vmatprep.mubr.bf16.mxu0 0
      %1632 = vmatmul.mubr.bf16.gmra.mrb[0].mxu0 %v1322
      %v1633 = vpop.f32.mrb[0].mxu0
      %v1634 = vadd.f32 %v1176, %v1633
      %v1635 = vpop.f32.mrb[0].mxu0
      %v1636 = vadd.f32 %v1180, %v1635
      %v1637 = vpop.f32.mrb[0].mxu0
      %v1638 = vadd.f32 %v1176, %v1637
      %v1639 = vpop.f32.mrb[0].mxu0
      %v1640 = vadd.f32 %v1180, %v1639
      %1641 = vmatprep.mubr.bf16.mxu0 0
      %1642 = vmatmul.mubr.bf16.gmra.mrb[0].mxu0 %v1325
      %v1643 = vpop.f32.mrb[0].mxu0
      %v1644 = vadd.f32 %v1176, %v1643
      %v1645 = vpop.f32.mrb[0].mxu0
      %v1646 = vadd.f32 %v1180, %v1645
      %v1647 = vpop.f32.mrb[0].mxu0
      %v1648 = vadd.f32 %v1176, %v1647
      %v1649 = vpop.f32.mrb[0].mxu0
      %v1650 = vadd.f32 %v1180, %v1649
      %1651 = vmatprep.mubr.bf16.mxu0 0
      %1652 = vmatmul.mubr.bf16.gmra.mrb[0].mxu0 %v1328
      %v1653 = vpop.f32.mrb[0].mxu0
      %v1654 = vadd.f32 %v1176, %v1653
      %v1655 = vpop.f32.mrb[0].mxu0
      %v1656 = vadd.f32 %v1180, %v1655
      %v1657 = vpop.f32.mrb[0].mxu0
      %v1658 = vadd.f32 %v1176, %v1657
      %v1659 = vpop.f32.mrb[0].mxu0
      %v1660 = vadd.f32 %v1180, %v1659
      %1661 = vmatprep.mubr.bf16.mxu0 0
      %1662 = vmatmul.mubr.bf16.gmra.mrb[0].mxu0 %v1331
      %v1663 = vpop.f32.mrb[0].mxu0
      %v1664 = vadd.f32 %v1176, %v1663
      %v1665 = vpop.f32.mrb[0].mxu0
      %v1666 = vadd.f32 %v1180, %v1665
      %v1667 = vpop.f32.mrb[0].mxu0
      %v1668 = vadd.f32 %v1176, %v1667
      %v1669 = vpop.f32.mrb[0].mxu0
      %v1670 = vadd.f32 %v1180, %v1669
      %1671 = vmatprep.mubr.bf16.mxu0 0
      %1672 = vmatmul.mubr.bf16.gmra.mrb[0].mxu0 %v1334
      %v1673 = vpop.f32.mrb[0].mxu0
      %v1674 = vadd.f32 %v1176, %v1673
      %v1675 = vpop.f32.mrb[0].mxu0
      %v1676 = vadd.f32 %v1180, %v1675
      %v1677 = vpop.f32.mrb[0].mxu0
      %v1678 = vadd.f32 %v1176, %v1677
      %v1679 = vpop.f32.mrb[0].mxu0
      %v1680 = vadd.f32 %v1180, %v1679
      %1681 = vmatprep.mubr.bf16.mxu0 0
      %1682 = vmatmul.mubr.bf16.gmra.mrb[0].mxu0 %v1337
      %v1683 = vpop.f32.mrb[0].mxu0
      %v1684 = vadd.f32 %v1176, %v1683
      %v1685 = vpop.f32.mrb[0].mxu0
      %v1686 = vadd.f32 %v1180, %v1685
      %v1687 = vpop.f32.mrb[0].mxu0
      %v1688 = vadd.f32 %v1176, %v1687
      %v1689 = vpop.f32.mrb[0].mxu0
      %v1690 = vadd.f32 %v1180, %v1689
      %1691 = vdwg.mxu0
      %v1692 = vsub.f32 0.0, %v1374
      %v1693 = vsub.f32 0.0, %v1376
      %v1694 = vsub.f32 0.0, %v1378
      %v1695 = vsub.f32 0.0, %v1380
      %v1696 = vsub.f32 0.0, %v1384
      %v1697 = vsub.f32 0.0, %v1386
      %v1698 = vsub.f32 0.0, %v1388
      %v1699 = vsub.f32 0.0, %v1390
      %v1700 = vsub.f32 0.0, %v1394
      %v1701 = vsub.f32 0.0, %v1396
      %v1702 = vsub.f32 0.0, %v1398
      %v1703 = vsub.f32 0.0, %v1400
      %v1704 = vsub.f32 0.0, %v1404
      %v1705 = vsub.f32 0.0, %v1406
      %v1706 = vsub.f32 0.0, %v1408
      %v1707 = vsub.f32 0.0, %v1410
      %v1708 = vsub.f32 0.0, %v1414
      %v1709 = vsub.f32 0.0, %v1416
      %v1710 = vsub.f32 0.0, %v1418
      %v1711 = vsub.f32 0.0, %v1420
      %v1712 = vsub.f32 0.0, %v1424
      %v1713 = vsub.f32 0.0, %v1426
      %v1714 = vsub.f32 0.0, %v1428
      %v1715 = vsub.f32 0.0, %v1430
      %v1716 = vsub.f32 0.0, %v1434
      %v1717 = vsub.f32 0.0, %v1436
      %v1718 = vsub.f32 0.0, %v1438
      %v1719 = vsub.f32 0.0, %v1440
      %v1720 = vsub.f32 0.0, %v1444
      %v1721 = vsub.f32 0.0, %v1446
      %v1722 = vsub.f32 0.0, %v1448
      %v1723 = vsub.f32 0.0, %v1450
      %v1724 = vsub.f32 0.0, %v1454
      %v1725 = vsub.f32 0.0, %v1456
      %v1726 = vsub.f32 0.0, %v1458
      %v1727 = vsub.f32 0.0, %v1460
      %v1728 = vsub.f32 0.0, %v1464
      %v1729 = vsub.f32 0.0, %v1466
      %v1730 = vsub.f32 0.0, %v1468
      %v1731 = vsub.f32 0.0, %v1470
      %v1732 = vsub.f32 0.0, %v1474
      %v1733 = vsub.f32 0.0, %v1476
      %v1734 = vsub.f32 0.0, %v1478
      %v1735 = vsub.f32 0.0, %v1480
      %v1736 = vsub.f32 0.0, %v1484
      %v1737 = vsub.f32 0.0, %v1486
      %v1738 = vsub.f32 0.0, %v1488
      %v1739 = vsub.f32 0.0, %v1490
      %v1740 = vsub.f32 0.0, %v1494
      %v1741 = vsub.f32 0.0, %v1496
      %v1742 = vsub.f32 0.0, %v1498
      %v1743 = vsub.f32 0.0, %v1500
      %v1744 = vsub.f32 0.0, %v1504
      %v1745 = vsub.f32 0.0, %v1506
      %v1746 = vsub.f32 0.0, %v1508
      %v1747 = vsub.f32 0.0, %v1510
      %v1748 = vsub.f32 0.0, %v1514
      %v1749 = vsub.f32 0.0, %v1516
      %v1750 = vsub.f32 0.0, %v1518
      %v1751 = vsub.f32 0.0, %v1520
      %v1752 = vsub.f32 0.0, %v1524
      %v1753 = vsub.f32 0.0, %v1526
      %v1754 = vsub.f32 0.0, %v1528
      %v1755 = vsub.f32 0.0, %v1530
      %v1756 = vsub.f32 0.0, %v1534
      %v1757 = vsub.f32 0.0, %v1536
      %v1758 = vsub.f32 0.0, %v1538
      %v1759 = vsub.f32 0.0, %v1540
      %v1760 = vsub.f32 0.0, %v1544
      %v1761 = vsub.f32 0.0, %v1546
      %v1762 = vsub.f32 0.0, %v1548
      %v1763 = vsub.f32 0.0, %v1550
      %v1764 = vsub.f32 0.0, %v1554
      %v1765 = vsub.f32 0.0, %v1556
      %v1766 = vsub.f32 0.0, %v1558
      %v1767 = vsub.f32 0.0, %v1560
      %v1768 = vsub.f32 0.0, %v1564
      %v1769 = vsub.f32 0.0, %v1566
      %v1770 = vsub.f32 0.0, %v1568
      %v1771 = vsub.f32 0.0, %v1570
      %v1772 = vsub.f32 0.0, %v1574
      %v1773 = vsub.f32 0.0, %v1576
      %v1774 = vsub.f32 0.0, %v1578
      %v1775 = vsub.f32 0.0, %v1580
      %v1776 = vsub.f32 0.0, %v1584
      %v1777 = vsub.f32 0.0, %v1586
      %v1778 = vsub.f32 0.0, %v1588
      %v1779 = vsub.f32 0.0, %v1590
      %v1780 = vsub.f32 0.0, %v1594
      %v1781 = vsub.f32 0.0, %v1596
      %v1782 = vsub.f32 0.0, %v1598
      %v1783 = vsub.f32 0.0, %v1600
      %v1784 = vsub.f32 0.0, %v1604
      %v1785 = vsub.f32 0.0, %v1606
      %v1786 = vsub.f32 0.0, %v1608
      %v1787 = vsub.f32 0.0, %v1610
      %v1788 = vsub.f32 0.0, %v1614
      %v1789 = vsub.f32 0.0, %v1616
      %v1790 = vsub.f32 0.0, %v1618
      %v1791 = vsub.f32 0.0, %v1620
      %v1792 = vsub.f32 0.0, %v1624
      %v1793 = vsub.f32 0.0, %v1626
      %v1794 = vsub.f32 0.0, %v1628
      %v1795 = vsub.f32 0.0, %v1630
      %v1796 = vsub.f32 0.0, %v1634
      %v1797 = vsub.f32 0.0, %v1636
      %v1798 = vsub.f32 0.0, %v1638
      %v1799 = vsub.f32 0.0, %v1640
      %v1800 = vsub.f32 0.0, %v1644
      %v1801 = vsub.f32 0.0, %v1646
      %v1802 = vsub.f32 0.0, %v1648
      %v1803 = vsub.f32 0.0, %v1650
      %v1804 = vsub.f32 0.0, %v1654
      %v1805 = vsub.f32 0.0, %v1656
      %v1806 = vsub.f32 0.0, %v1658
      %v1807 = vsub.f32 0.0, %v1660
      %v1808 = vsub.f32 0.0, %v1664
      %v1809 = vsub.f32 0.0, %v1666
      %v1810 = vsub.f32 0.0, %v1668
      %v1811 = vsub.f32 0.0, %v1670
      %v1812 = vsub.f32 0.0, %v1674
      %v1813 = vsub.f32 0.0, %v1676
      %v1814 = vsub.f32 0.0, %v1678
      %v1815 = vsub.f32 0.0, %v1680
      %v1816 = vsub.f32 0.0, %v1684
      %v1817 = vsub.f32 0.0, %v1686
      %v1818 = vsub.f32 0.0, %v1688
      %v1819 = vsub.f32 0.0, %v1690
      %v1820 = vmul.f32 %v1692, 1.442695
      %v1821 = vpow.pop %v1820
      %v1822 = vmul.f32 %v1693, 1.442695
      %v1823 = vpow.pop %v1822
      %v1824 = vmul.f32 %v1694, 1.442695
      %v1825 = vpow.pop %v1824
      %v1826 = vmul.f32 %v1695, 1.442695
      %v1827 = vpow.pop %v1826
      %v1828 = vmul.f32 %v1696, 1.442695
      %v1829 = vpow.pop %v1828
      %v1830 = vmul.f32 %v1697, 1.442695
      %v1831 = vpow.pop %v1830
      %v1832 = vmul.f32 %v1698, 1.442695
      %v1833 = vpow.pop %v1832
      %v1834 = vmul.f32 %v1699, 1.442695
      %v1835 = vpow.pop %v1834
      %v1836 = vmul.f32 %v1700, 1.442695
      %v1837 = vpow.pop %v1836
      %v1838 = vmul.f32 %v1701, 1.442695
      %v1839 = vpow.pop %v1838
      %v1840 = vmul.f32 %v1702, 1.442695
      %v1841 = vpow.pop %v1840
      %v1842 = vmul.f32 %v1703, 1.442695
      %v1843 = vpow.pop %v1842
      %v1844 = vmul.f32 %v1704, 1.442695
      %v1845 = vpow.pop %v1844
      %v1846 = vmul.f32 %v1705, 1.442695
      %v1847 = vpow.pop %v1846
      %v1848 = vmul.f32 %v1706, 1.442695
      %v1849 = vpow.pop %v1848
      %v1850 = vmul.f32 %v1707, 1.442695
      %v1851 = vpow.pop %v1850
      %v1852 = vmul.f32 %v1708, 1.442695
      %v1853 = vpow.pop %v1852
      %v1854 = vmul.f32 %v1709, 1.442695
      %v1855 = vpow.pop %v1854
      %v1856 = vmul.f32 %v1710, 1.442695
      %v1857 = vpow.pop %v1856
      %v1858 = vmul.f32 %v1711, 1.442695
      %v1859 = vpow.pop %v1858
      %v1860 = vmul.f32 %v1712, 1.442695
      %v1861 = vpow.pop %v1860
      %v1862 = vmul.f32 %v1713, 1.442695
      %v1863 = vpow.pop %v1862
      %v1864 = vmul.f32 %v1714, 1.442695
      %v1865 = vpow.pop %v1864
      %v1866 = vmul.f32 %v1715, 1.442695
      %v1867 = vpow.pop %v1866
      %v1868 = vmul.f32 %v1716, 1.442695
      %v1869 = vpow.pop %v1868
      %v1870 = vmul.f32 %v1717, 1.442695
      %v1871 = vpow.pop %v1870
      %v1872 = vmul.f32 %v1718, 1.442695
      %v1873 = vpow.pop %v1872
      %v1874 = vmul.f32 %v1719, 1.442695
      %v1875 = vpow.pop %v1874
      %v1876 = vmul.f32 %v1720, 1.442695
      %v1877 = vpow.pop %v1876
      %v1878 = vmul.f32 %v1721, 1.442695
      %v1879 = vpow.pop %v1878
      %v1880 = vmul.f32 %v1722, 1.442695
      %v1881 = vpow.pop %v1880
      %v1882 = vmul.f32 %v1723, 1.442695
      %v1883 = vpow.pop %v1882
      %v1884 = vmul.f32 %v1724, 1.442695
      %v1885 = vpow.pop %v1884
      %v1886 = vmul.f32 %v1725, 1.442695
      %v1887 = vpow.pop %v1886
      %v1888 = vmul.f32 %v1726, 1.442695
      %v1889 = vpow.pop %v1888
      %v1890 = vmul.f32 %v1727, 1.442695
      %v1891 = vpow.pop %v1890
      %v1892 = vmul.f32 %v1728, 1.442695
      %v1893 = vpow.pop %v1892
      %v1894 = vmul.f32 %v1729, 1.442695
      %v1895 = vpow.pop %v1894
      %v1896 = vmul.f32 %v1730, 1.442695
      %v1897 = vpow.pop %v1896
      %v1898 = vmul.f32 %v1731, 1.442695
      %v1899 = vpow.pop %v1898
      %v1900 = vmul.f32 %v1732, 1.442695
      %v1901 = vpow.pop %v1900
      %v1902 = vmul.f32 %v1733, 1.442695
      %v1903 = vpow.pop %v1902
      %v1904 = vmul.f32 %v1734, 1.442695
      %v1905 = vpow.pop %v1904
      %v1906 = vmul.f32 %v1735, 1.442695
      %v1907 = vpow.pop %v1906
      %v1908 = vmul.f32 %v1736, 1.442695
      %v1909 = vpow.pop %v1908
      %v1910 = vmul.f32 %v1737, 1.442695
      %v1911 = vpow.pop %v1910
      %v1912 = vmul.f32 %v1738, 1.442695
      %v1913 = vpow.pop %v1912
      %v1914 = vmul.f32 %v1739, 1.442695
      %v1915 = vpow.pop %v1914
      %v1916 = vmul.f32 %v1740, 1.442695
      %v1917 = vpow.pop %v1916
      %v1918 = vmul.f32 %v1741, 1.442695
      %v1919 = vpow.pop %v1918
      %v1920 = vmul.f32 %v1742, 1.442695
      %v1921 = vpow.pop %v1920
      %v1922 = vmul.f32 %v1743, 1.442695
      %v1923 = vpow.pop %v1922
      %v1924 = vmul.f32 %v1744, 1.442695
      %v1925 = vpow.pop %v1924
      %v1926 = vmul.f32 %v1745, 1.442695
      %v1927 = vpow.pop %v1926
      %v1928 = vmul.f32 %v1746, 1.442695
      %v1929 = vpow.pop %v1928
      %v1930 = vmul.f32 %v1747, 1.442695
      %v1931 = vpow.pop %v1930
      %v1932 = vmul.f32 %v1748, 1.442695
      %v1933 = vpow.pop %v1932
      %v1934 = vmul.f32 %v1749, 1.442695
      %v1935 = vpow.pop %v1934
      %v1936 = vmul.f32 %v1750, 1.442695
      %v1937 = vpow.pop %v1936
      %v1938 = vmul.f32 %v1751, 1.442695
      %v1939 = vpow.pop %v1938
      %v1940 = vmul.f32 %v1752, 1.442695
      %v1941 = vpow.pop %v1940
      %v1942 = vmul.f32 %v1753, 1.442695
      %v1943 = vpow.pop %v1942
      %v1944 = vmul.f32 %v1754, 1.442695
      %v1945 = vpow.pop %v1944
      %v1946 = vmul.f32 %v1755, 1.442695
      %v1947 = vpow.pop %v1946
      %v1948 = vmul.f32 %v1756, 1.442695
      %v1949 = vpow.pop %v1948
      %v1950 = vmul.f32 %v1757, 1.442695
      %v1951 = vpow.pop %v1950
      %v1952 = vmul.f32 %v1758, 1.442695
      %v1953 = vpow.pop %v1952
      %v1954 = vmul.f32 %v1759, 1.442695
      %v1955 = vpow.pop %v1954
      %v1956 = vmul.f32 %v1760, 1.442695
      %v1957 = vpow.pop %v1956
      %v1958 = vmul.f32 %v1761, 1.442695
      %v1959 = vpow.pop %v1958
      %v1960 = vmul.f32 %v1762, 1.442695
      %v1961 = vpow.pop %v1960
      %v1962 = vmul.f32 %v1763, 1.442695
      %v1963 = vpow.pop %v1962
      %v1964 = vmul.f32 %v1764, 1.442695
      %v1965 = vpow.pop %v1964
      %v1966 = vmul.f32 %v1765, 1.442695
      %v1967 = vpow.pop %v1966
      %v1968 = vmul.f32 %v1766, 1.442695
      %v1969 = vpow.pop %v1968
      %v1970 = vmul.f32 %v1767, 1.442695
      %v1971 = vpow.pop %v1970
      %v1972 = vmul.f32 %v1768, 1.442695
      %v1973 = vpow.pop %v1972
      %v1974 = vmul.f32 %v1769, 1.442695
      %v1975 = vpow.pop %v1974
      %v1976 = vmul.f32 %v1770, 1.442695
      %v1977 = vpow.pop %v1976
      %v1978 = vmul.f32 %v1771, 1.442695
      %v1979 = vpow.pop %v1978
      %v1980 = vmul.f32 %v1772, 1.442695
      %v1981 = vpow.pop %v1980
      %v1982 = vmul.f32 %v1773, 1.442695
      %v1983 = vpow.pop %v1982
      %v1984 = vmul.f32 %v1774, 1.442695
      %v1985 = vpow.pop %v1984
      %v1986 = vmul.f32 %v1775, 1.442695
      %v1987 = vpow.pop %v1986
      %v1988 = vmul.f32 %v1776, 1.442695
      %v1989 = vpow.pop %v1988
      %v1990 = vmul.f32 %v1777, 1.442695
      %v1991 = vpow.pop %v1990
      %v1992 = vmul.f32 %v1778, 1.442695
      %v1993 = vpow.pop %v1992
      %v1994 = vmul.f32 %v1779, 1.442695
      %v1995 = vpow.pop %v1994
      %v1996 = vmul.f32 %v1780, 1.442695
      %v1997 = vpow.pop %v1996
      %v1998 = vmul.f32 %v1781, 1.442695
      %v1999 = vpow.pop %v1998
      %v2000 = vmul.f32 %v1782, 1.442695
      %v2001 = vpow.pop %v2000
      %v2002 = vmul.f32 %v1783, 1.442695
      %v2003 = vpow.pop %v2002
      %v2004 = vmul.f32 %v1784, 1.442695
      %v2005 = vpow.pop %v2004
      %v2006 = vmul.f32 %v1785, 1.442695
      %v2007 = vpow.pop %v2006
      %v2008 = vmul.f32 %v1786, 1.442695
      %v2009 = vpow.pop %v2008
      %v2010 = vmul.f32 %v1787, 1.442695
      %v2011 = vpow.pop %v2010
      %v2012 = vmul.f32 %v1788, 1.442695
      %v2013 = vpow.pop %v2012
      %v2014 = vmul.f32 %v1789, 1.442695
      %v2015 = vpow.pop %v2014
      %v2016 = vmul.f32 %v1790, 1.442695
      %v2017 = vpow.pop %v2016
      %v2018 = vmul.f32 %v1791, 1.442695
      %v2019 = vpow.pop %v2018
      %v2020 = vmul.f32 %v1792, 1.442695
      %v2021 = vpow.pop %v2020
      %v2022 = vmul.f32 %v1793, 1.442695
      %v2023 = vpow.pop %v2022
      %v2024 = vmul.f32 %v1794, 1.442695
      %v2025 = vpow.pop %v2024
      %v2026 = vmul.f32 %v1795, 1.442695
      %v2027 = vpow.pop %v2026
      %v2028 = vmul.f32 %v1796, 1.442695
      %v2029 = vpow.pop %v2028
      %v2030 = vmul.f32 %v1797, 1.442695
      %v2031 = vpow.pop %v2030
      %v2032 = vmul.f32 %v1798, 1.442695
      %v2033 = vpow.pop %v2032
      %v2034 = vmul.f32 %v1799, 1.442695
      %v2035 = vpow.pop %v2034
      %v2036 = vmul.f32 %v1800, 1.442695
      %v2037 = vpow.pop %v2036
      %v2038 = vmul.f32 %v1801, 1.442695
      %v2039 = vpow.pop %v2038
      %v2040 = vmul.f32 %v1802, 1.442695
      %v2041 = vpow.pop %v2040
      %v2042 = vmul.f32 %v1803, 1.442695
      %v2043 = vpow.pop %v2042
      %v2044 = vmul.f32 %v1804, 1.442695
      %v2045 = vpow.pop %v2044
      %v2046 = vmul.f32 %v1805, 1.442695
      %v2047 = vpow.pop %v2046
      %v2048 = vmul.f32 %v1806, 1.442695
      %v2049 = vpow.pop %v2048
      %v2050 = vmul.f32 %v1807, 1.442695
      %v2051 = vpow.pop %v2050
      %v2052 = vmul.f32 %v1808, 1.442695
      %v2053 = vpow.pop %v2052
      %v2054 = vmul.f32 %v1809, 1.442695
      %v2055 = vpow.pop %v2054
      %v2056 = vmul.f32 %v1810, 1.442695
      %v2057 = vpow.pop %v2056
      %v2058 = vmul.f32 %v1811, 1.442695
      %v2059 = vpow.pop %v2058
      %v2060 = vmul.f32 %v1812, 1.442695
      %v2061 = vpow.pop %v2060
      %v2062 = vmul.f32 %v1813, 1.442695
      %v2063 = vpow.pop %v2062
      %v2064 = vmul.f32 %v1814, 1.442695
      %v2065 = vpow.pop %v2064
      %v2066 = vmul.f32 %v1815, 1.442695
      %v2067 = vpow.pop %v2066
      %v2068 = vmul.f32 %v1816, 1.442695
      %v2069 = vpow.pop %v2068
      %v2070 = vmul.f32 %v1817, 1.442695
      %v2071 = vpow.pop %v2070
      %v2072 = vmul.f32 %v1818, 1.442695
      %v2073 = vpow.pop %v2072
      %v2074 = vmul.f32 %v1819, 1.442695
      %v2075 = vpow.pop %v2074
      %v2076 = vadd.f32 %v1821, 1.0
      %v2077 = vadd.f32 %v1823, 1.0
      %v2078 = vadd.f32 %v1825, 1.0
      %v2079 = vadd.f32 %v1827, 1.0
      %v2080 = vadd.f32 %v1829, 1.0
      %v2081 = vadd.f32 %v1831, 1.0
      %v2082 = vadd.f32 %v1833, 1.0
      %v2083 = vadd.f32 %v1835, 1.0
      %v2084 = vadd.f32 %v1837, 1.0
      %v2085 = vadd.f32 %v1839, 1.0
      %v2086 = vadd.f32 %v1841, 1.0
      %v2087 = vadd.f32 %v1843, 1.0
      %v2088 = vadd.f32 %v1845, 1.0
      %v2089 = vadd.f32 %v1847, 1.0
      %v2090 = vadd.f32 %v1849, 1.0
      %v2091 = vadd.f32 %v1851, 1.0
      %v2092 = vadd.f32 %v1853, 1.0
      %v2093 = vadd.f32 %v1855, 1.0
      %v2094 = vadd.f32 %v1857, 1.0
      %v2095 = vadd.f32 %v1859, 1.0
      %v2096 = vadd.f32 %v1861, 1.0
      %v2097 = vadd.f32 %v1863, 1.0
      %v2098 = vadd.f32 %v1865, 1.0
      %v2099 = vadd.f32 %v1867, 1.0
      %v2100 = vadd.f32 %v1869, 1.0
      %v2101 = vadd.f32 %v1871, 1.0
      %v2102 = vadd.f32 %v1873, 1.0
      %v2103 = vadd.f32 %v1875, 1.0
      %v2104 = vadd.f32 %v1877, 1.0
      %v2105 = vadd.f32 %v1879, 1.0
      %v2106 = vadd.f32 %v1881, 1.0
      %v2107 = vadd.f32 %v1883, 1.0
      %v2108 = vadd.f32 %v1885, 1.0
      %v2109 = vadd.f32 %v1887, 1.0
      %v2110 = vadd.f32 %v1889, 1.0
      %v2111 = vadd.f32 %v1891, 1.0
      %v2112 = vadd.f32 %v1893, 1.0
      %v2113 = vadd.f32 %v1895, 1.0
      %v2114 = vadd.f32 %v1897, 1.0
      %v2115 = vadd.f32 %v1899, 1.0
      %v2116 = vadd.f32 %v1901, 1.0
      %v2117 = vadd.f32 %v1903, 1.0
      %v2118 = vadd.f32 %v1905, 1.0
      %v2119 = vadd.f32 %v1907, 1.0
      %v2120 = vadd.f32 %v1909, 1.0
      %v2121 = vadd.f32 %v1911, 1.0
      %v2122 = vadd.f32 %v1913, 1.0
      %v2123 = vadd.f32 %v1915, 1.0
      %v2124 = vadd.f32 %v1917, 1.0
      %v2125 = vadd.f32 %v1919, 1.0
      %v2126 = vadd.f32 %v1921, 1.0
      %v2127 = vadd.f32 %v1923, 1.0
      %v2128 = vadd.f32 %v1925, 1.0
      %v2129 = vadd.f32 %v1927, 1.0
      %v2130 = vadd.f32 %v1929, 1.0
      %v2131 = vadd.f32 %v1931, 1.0
      %v2132 = vadd.f32 %v1933, 1.0
      %v2133 = vadd.f32 %v1935, 1.0
      %v2134 = vadd.f32 %v1937, 1.0
      %v2135 = vadd.f32 %v1939, 1.0
      %v2136 = vadd.f32 %v1941, 1.0
      %v2137 = vadd.f32 %v1943, 1.0
      %v2138 = vadd.f32 %v1945, 1.0
      %v2139 = vadd.f32 %v1947, 1.0
      %v2140 = vadd.f32 %v1949, 1.0
      %v2141 = vadd.f32 %v1951, 1.0
      %v2142 = vadd.f32 %v1953, 1.0
      %v2143 = vadd.f32 %v1955, 1.0
      %v2144 = vadd.f32 %v1957, 1.0
      %v2145 = vadd.f32 %v1959, 1.0
      %v2146 = vadd.f32 %v1961, 1.0
      %v2147 = vadd.f32 %v1963, 1.0
      %v2148 = vadd.f32 %v1965, 1.0
      %v2149 = vadd.f32 %v1967, 1.0
      %v2150 = vadd.f32 %v1969, 1.0
      %v2151 = vadd.f32 %v1971, 1.0
      %v2152 = vadd.f32 %v1973, 1.0
      %v2153 = vadd.f32 %v1975, 1.0
      %v2154 = vadd.f32 %v1977, 1.0
      %v2155 = vadd.f32 %v1979, 1.0
      %v2156 = vadd.f32 %v1981, 1.0
      %v2157 = vadd.f32 %v1983, 1.0
      %v2158 = vadd.f32 %v1985, 1.0
      %v2159 = vadd.f32 %v1987, 1.0
      %v2160 = vadd.f32 %v1989, 1.0
      %v2161 = vadd.f32 %v1991, 1.0
      %v2162 = vadd.f32 %v1993, 1.0
      %v2163 = vadd.f32 %v1995, 1.0
      %v2164 = vadd.f32 %v1997, 1.0
      %v2165 = vadd.f32 %v1999, 1.0
      %v2166 = vadd.f32 %v2001, 1.0
      %v2167 = vadd.f32 %v2003, 1.0
      %v2168 = vadd.f32 %v2005, 1.0
      %v2169 = vadd.f32 %v2007, 1.0
      %v2170 = vadd.f32 %v2009, 1.0
      %v2171 = vadd.f32 %v2011, 1.0
      %v2172 = vadd.f32 %v2013, 1.0
      %v2173 = vadd.f32 %v2015, 1.0
      %v2174 = vadd.f32 %v2017, 1.0
      %v2175 = vadd.f32 %v2019, 1.0
      %v2176 = vadd.f32 %v2021, 1.0
      %v2177 = vadd.f32 %v2023, 1.0
      %v2178 = vadd.f32 %v2025, 1.0
      %v2179 = vadd.f32 %v2027, 1.0
      %v2180 = vadd.f32 %v2029, 1.0
      %v2181 = vadd.f32 %v2031, 1.0
      %v2182 = vadd.f32 %v2033, 1.0
      %v2183 = vadd.f32 %v2035, 1.0
      %v2184 = vadd.f32 %v2037, 1.0
      %v2185 = vadd.f32 %v2039, 1.0
      %v2186 = vadd.f32 %v2041, 1.0
      %v2187 = vadd.f32 %v2043, 1.0
      %v2188 = vadd.f32 %v2045, 1.0
      %v2189 = vadd.f32 %v2047, 1.0
      %v2190 = vadd.f32 %v2049, 1.0
      %v2191 = vadd.f32 %v2051, 1.0
      %v2192 = vadd.f32 %v2053, 1.0
      %v2193 = vadd.f32 %v2055, 1.0
      %v2194 = vadd.f32 %v2057, 1.0
      %v2195 = vadd.f32 %v2059, 1.0
      %v2196 = vadd.f32 %v2061, 1.0
      %v2197 = vadd.f32 %v2063, 1.0
      %v2198 = vadd.f32 %v2065, 1.0
      %v2199 = vadd.f32 %v2067, 1.0
      %v2200 = vadd.f32 %v2069, 1.0
      %v2201 = vadd.f32 %v2071, 1.0
      %v2202 = vadd.f32 %v2073, 1.0
      %v2203 = vadd.f32 %v2075, 1.0
      %v2204 = vrcp.pop %v2076
      %v2205 = vrcp.pop %v2077
      %v2206 = vrcp.pop %v2078
      %v2207 = vrcp.pop %v2079
      %v2208 = vrcp.pop %v2080
      %v2209 = vrcp.pop %v2081
      %v2210 = vrcp.pop %v2082
      %v2211 = vrcp.pop %v2083
      %v2212 = vrcp.pop %v2084
      %v2213 = vrcp.pop %v2085
      %v2214 = vrcp.pop %v2086
      %v2215 = vrcp.pop %v2087
      %v2216 = vrcp.pop %v2088
      %v2217 = vrcp.pop %v2089
      %v2218 = vrcp.pop %v2090
      %v2219 = vrcp.pop %v2091
      %v2220 = vrcp.pop %v2092
      %v2221 = vrcp.pop %v2093
      %v2222 = vrcp.pop %v2094
      %v2223 = vrcp.pop %v2095
      %v2224 = vrcp.pop %v2096
      %v2225 = vrcp.pop %v2097
      %v2226 = vrcp.pop %v2098
      %v2227 = vrcp.pop %v2099
      %v2228 = vrcp.pop %v2100
      %v2229 = vrcp.pop %v2101
      %v2230 = vrcp.pop %v2102
      %v2231 = vrcp.pop %v2103
      %v2232 = vrcp.pop %v2104
      %v2233 = vrcp.pop %v2105
      %v2234 = vrcp.pop %v2106
      %v2235 = vrcp.pop %v2107
      %v2236 = vrcp.pop %v2108
      %v2237 = vrcp.pop %v2109
      %v2238 = vrcp.pop %v2110
      %v2239 = vrcp.pop %v2111
      %v2240 = vrcp.pop %v2112
      %v2241 = vrcp.pop %v2113
      %v2242 = vrcp.pop %v2114
      %v2243 = vrcp.pop %v2115
      %v2244 = vrcp.pop %v2116
      %v2245 = vrcp.pop %v2117
      %v2246 = vrcp.pop %v2118
      %v2247 = vrcp.pop %v2119
      %v2248 = vrcp.pop %v2120
      %v2249 = vrcp.pop %v2121
      %v2250 = vrcp.pop %v2122
      %v2251 = vrcp.pop %v2123
      %v2252 = vrcp.pop %v2124
      %v2253 = vrcp.pop %v2125
      %v2254 = vrcp.pop %v2126
      %v2255 = vrcp.pop %v2127
      %v2256 = vrcp.pop %v2128
      %v2257 = vrcp.pop %v2129
      %v2258 = vrcp.pop %v2130
      %v2259 = vrcp.pop %v2131
      %v2260 = vrcp.pop %v2132
      %v2261 = vrcp.pop %v2133
      %v2262 = vrcp.pop %v2134
      %v2263 = vrcp.pop %v2135
      %v2264 = vrcp.pop %v2136
      %v2265 = vrcp.pop %v2137
      %v2266 = vrcp.pop %v2138
      %v2267 = vrcp.pop %v2139
      %v2268 = vrcp.pop %v2140
      %v2269 = vrcp.pop %v2141
      %v2270 = vrcp.pop %v2142
      %v2271 = vrcp.pop %v2143
      %v2272 = vrcp.pop %v2144
      %v2273 = vrcp.pop %v2145
      %v2274 = vrcp.pop %v2146
      %v2275 = vrcp.pop %v2147
      %v2276 = vrcp.pop %v2148
      %v2277 = vrcp.pop %v2149
      %v2278 = vrcp.pop %v2150
      %v2279 = vrcp.pop %v2151
      %v2280 = vrcp.pop %v2152
      %v2281 = vrcp.pop %v2153
      %v2282 = vrcp.pop %v2154
      %v2283 = vrcp.pop %v2155
      %v2284 = vrcp.pop %v2156
      %v2285 = vrcp.pop %v2157
      %v2286 = vrcp.pop %v2158
      %v2287 = vrcp.pop %v2159
      %v2288 = vrcp.pop %v2160
      %v2289 = vrcp.pop %v2161
      %v2290 = vrcp.pop %v2162
      %v2291 = vrcp.pop %v2163
      %v2292 = vrcp.pop %v2164
      %v2293 = vrcp.pop %v2165
      %v2294 = vrcp.pop %v2166
      %v2295 = vrcp.pop %v2167
      %v2296 = vrcp.pop %v2168
      %v2297 = vrcp.pop %v2169
      %v2298 = vrcp.pop %v2170
      %v2299 = vrcp.pop %v2171
      %v2300 = vrcp.pop %v2172
      %v2301 = vrcp.pop %v2173
      %v2302 = vrcp.pop %v2174
      %v2303 = vrcp.pop %v2175
      %v2304 = vrcp.pop %v2176
      %v2305 = vrcp.pop %v2177
      %v2306 = vrcp.pop %v2178
      %v2307 = vrcp.pop %v2179
      %v2308 = vrcp.pop %v2180
      %v2309 = vrcp.pop %v2181
      %v2310 = vrcp.pop %v2182
      %v2311 = vrcp.pop %v2183
      %v2312 = vrcp.pop %v2184
      %v2313 = vrcp.pop %v2185
      %v2314 = vrcp.pop %v2186
      %v2315 = vrcp.pop %v2187
      %v2316 = vrcp.pop %v2188
      %v2317 = vrcp.pop %v2189
      %v2318 = vrcp.pop %v2190
      %v2319 = vrcp.pop %v2191
      %v2320 = vrcp.pop %v2192
      %v2321 = vrcp.pop %v2193
      %v2322 = vrcp.pop %v2194
      %v2323 = vrcp.pop %v2195
      %v2324 = vrcp.pop %v2196
      %v2325 = vrcp.pop %v2197
      %v2326 = vrcp.pop %v2198
      %v2327 = vrcp.pop %v2199
      %v2328 = vrcp.pop %v2200
      %v2329 = vrcp.pop %v2201
      %v2330 = vrcp.pop %v2202
      %v2331 = vrcp.pop %v2203
      %v2332 = vmul.f32 %v1374, %v2204
      %v2333 = vmul.f32 %v1376, %v2205
      %v2334 = vmul.f32 %v1378, %v2206
      %v2335 = vmul.f32 %v1380, %v2207
      %v2336 = vmul.f32 %v1384, %v2208
      %v2337 = vmul.f32 %v1386, %v2209
      %v2338 = vmul.f32 %v1388, %v2210
      %v2339 = vmul.f32 %v1390, %v2211
      %v2340 = vmul.f32 %v1394, %v2212
      %v2341 = vmul.f32 %v1396, %v2213
      %v2342 = vmul.f32 %v1398, %v2214
      %v2343 = vmul.f32 %v1400, %v2215
      %v2344 = vmul.f32 %v1404, %v2216
      %v2345 = vmul.f32 %v1406, %v2217
      %v2346 = vmul.f32 %v1408, %v2218
      %v2347 = vmul.f32 %v1410, %v2219
      %v2348 = vmul.f32 %v1414, %v2220
      %v2349 = vmul.f32 %v1416, %v2221
      %v2350 = vmul.f32 %v1418, %v2222
      %v2351 = vmul.f32 %v1420, %v2223
      %v2352 = vmul.f32 %v1424, %v2224
      %v2353 = vmul.f32 %v1426, %v2225
      %v2354 = vmul.f32 %v1428, %v2226
      %v2355 = vmul.f32 %v1430, %v2227
      %v2356 = vmul.f32 %v1434, %v2228
      %v2357 = vmul.f32 %v1436, %v2229
      %v2358 = vmul.f32 %v1438, %v2230
      %v2359 = vmul.f32 %v1440, %v2231
      %v2360 = vmul.f32 %v1444, %v2232
      %v2361 = vmul.f32 %v1446, %v2233
      %v2362 = vmul.f32 %v1448, %v2234
      %v2363 = vmul.f32 %v1450, %v2235
      %v2364 = vmul.f32 %v1454, %v2236
      %v2365 = vmul.f32 %v1456, %v2237
      %v2366 = vmul.f32 %v1458, %v2238
      %v2367 = vmul.f32 %v1460, %v2239
      %v2368 = vmul.f32 %v1464, %v2240
      %v2369 = vmul.f32 %v1466, %v2241
      %v2370 = vmul.f32 %v1468, %v2242
      %v2371 = vmul.f32 %v1470, %v2243
      %v2372 = vmul.f32 %v1474, %v2244
      %v2373 = vmul.f32 %v1476, %v2245
      %v2374 = vmul.f32 %v1478, %v2246
      %v2375 = vmul.f32 %v1480, %v2247
      %v2376 = vmul.f32 %v1484, %v2248
      %v2377 = vmul.f32 %v1486, %v2249
      %v2378 = vmul.f32 %v1488, %v2250
      %v2379 = vmul.f32 %v1490, %v2251
      %v2380 = vmul.f32 %v1494, %v2252
      %v2381 = vmul.f32 %v1496, %v2253
      %v2382 = vmul.f32 %v1498, %v2254
      %v2383 = vmul.f32 %v1500, %v2255
      %v2384 = vmul.f32 %v1504, %v2256
      %v2385 = vmul.f32 %v1506, %v2257
      %v2386 = vmul.f32 %v1508, %v2258
      %v2387 = vmul.f32 %v1510, %v2259
      %v2388 = vmul.f32 %v1514, %v2260
      %v2389 = vmul.f32 %v1516, %v2261
      %v2390 = vmul.f32 %v1518, %v2262
      %v2391 = vmul.f32 %v1520, %v2263
      %v2392 = vmul.f32 %v1524, %v2264
      %v2393 = vmul.f32 %v1526, %v2265
      %v2394 = vmul.f32 %v1528, %v2266
      %v2395 = vmul.f32 %v1530, %v2267
      %v2396 = vmul.f32 %v1534, %v2268
      %v2397 = vmul.f32 %v1536, %v2269
      %v2398 = vmul.f32 %v1538, %v2270
      %v2399 = vmul.f32 %v1540, %v2271
      %v2400 = vmul.f32 %v1544, %v2272
      %v2401 = vmul.f32 %v1546, %v2273
      %v2402 = vmul.f32 %v1548, %v2274
      %v2403 = vmul.f32 %v1550, %v2275
      %v2404 = vmul.f32 %v1554, %v2276
      %v2405 = vmul.f32 %v1556, %v2277
      %v2406 = vmul.f32 %v1558, %v2278
      %v2407 = vmul.f32 %v1560, %v2279
      %v2408 = vmul.f32 %v1564, %v2280
      %v2409 = vmul.f32 %v1566, %v2281
      %v2410 = vmul.f32 %v1568, %v2282
      %v2411 = vmul.f32 %v1570, %v2283
      %v2412 = vmul.f32 %v1574, %v2284
      %v2413 = vmul.f32 %v1576, %v2285
      %v2414 = vmul.f32 %v1578, %v2286
      %v2415 = vmul.f32 %v1580, %v2287
      %v2416 = vmul.f32 %v1584, %v2288
      %v2417 = vmul.f32 %v1586, %v2289
      %v2418 = vmul.f32 %v1588, %v2290
      %v2419 = vmul.f32 %v1590, %v2291
      %v2420 = vmul.f32 %v1594, %v2292
      %v2421 = vmul.f32 %v1596, %v2293
      %v2422 = vmul.f32 %v1598, %v2294
      %v2423 = vmul.f32 %v1600, %v2295
      %v2424 = vmul.f32 %v1604, %v2296
      %v2425 = vmul.f32 %v1606, %v2297
      %v2426 = vmul.f32 %v1608, %v2298
      %v2427 = vmul.f32 %v1610, %v2299
      %v2428 = vmul.f32 %v1614, %v2300
      %v2429 = vmul.f32 %v1616, %v2301
      %v2430 = vmul.f32 %v1618, %v2302
      %v2431 = vmul.f32 %v1620, %v2303
      %v2432 = vmul.f32 %v1624, %v2304
      %v2433 = vmul.f32 %v1626, %v2305
      %v2434 = vmul.f32 %v1628, %v2306
      %v2435 = vmul.f32 %v1630, %v2307
      %v2436 = vmul.f32 %v1634, %v2308
      %v2437 = vmul.f32 %v1636, %v2309
      %v2438 = vmul.f32 %v1638, %v2310
      %v2439 = vmul.f32 %v1640, %v2311
      %v2440 = vmul.f32 %v1644, %v2312
      %v2441 = vmul.f32 %v1646, %v2313
      %v2442 = vmul.f32 %v1648, %v2314
      %v2443 = vmul.f32 %v1650, %v2315
      %v2444 = vmul.f32 %v1654, %v2316
      %v2445 = vmul.f32 %v1656, %v2317
      %v2446 = vmul.f32 %v1658, %v2318
      %v2447 = vmul.f32 %v1660, %v2319
      %v2448 = vmul.f32 %v1664, %v2320
      %v2449 = vmul.f32 %v1666, %v2321
      %v2450 = vmul.f32 %v1668, %v2322
      %v2451 = vmul.f32 %v1670, %v2323
      %v2452 = vmul.f32 %v1674, %v2324
      %v2453 = vmul.f32 %v1676, %v2325
      %v2454 = vmul.f32 %v1678, %v2326
      %v2455 = vmul.f32 %v1680, %v2327
      %v2456 = vmul.f32 %v1684, %v2328
      %v2457 = vmul.f32 %v1686, %v2329
      %v2458 = vmul.f32 %v1688, %v2330
      %v2459 = vmul.f32 %v1690, %v2331
      %v2460 = vpack.c.bf16 %v2334, %v2332
      %v2461 = vpack.c.bf16 %v2335, %v2333
      %v2462 = vpack.c.bf16 %v2338, %v2336
      %v2463 = vpack.c.bf16 %v2339, %v2337
      %v2464 = vpack.c.bf16 %v2342, %v2340
      %v2465 = vpack.c.bf16 %v2343, %v2341
      %v2466 = vpack.c.bf16 %v2346, %v2344
      %v2467 = vpack.c.bf16 %v2347, %v2345
      %v2468 = vpack.c.bf16 %v2350, %v2348
      %v2469 = vpack.c.bf16 %v2351, %v2349
      %v2470 = vpack.c.bf16 %v2354, %v2352
      %v2471 = vpack.c.bf16 %v2355, %v2353
      %v2472 = vpack.c.bf16 %v2358, %v2356
      %v2473 = vpack.c.bf16 %v2359, %v2357
      %v2474 = vpack.c.bf16 %v2362, %v2360
      %v2475 = vpack.c.bf16 %v2363, %v2361
      %v2476 = vpack.c.bf16 %v2366, %v2364
      %v2477 = vpack.c.bf16 %v2367, %v2365
      %v2478 = vpack.c.bf16 %v2370, %v2368
      %v2479 = vpack.c.bf16 %v2371, %v2369
      %v2480 = vpack.c.bf16 %v2374, %v2372
      %v2481 = vpack.c.bf16 %v2375, %v2373
      %v2482 = vpack.c.bf16 %v2378, %v2376
      %v2483 = vpack.c.bf16 %v2379, %v2377
      %v2484 = vpack.c.bf16 %v2382, %v2380
      %v2485 = vpack.c.bf16 %v2383, %v2381
      %v2486 = vpack.c.bf16 %v2386, %v2384
      %v2487 = vpack.c.bf16 %v2387, %v2385
      %v2488 = vpack.c.bf16 %v2390, %v2388
      %v2489 = vpack.c.bf16 %v2391, %v2389
      %v2490 = vpack.c.bf16 %v2394, %v2392
      %v2491 = vpack.c.bf16 %v2395, %v2393
      %v2492 = vpack.c.bf16 %v2398, %v2396
      %v2493 = vpack.c.bf16 %v2399, %v2397
      %v2494 = vpack.c.bf16 %v2402, %v2400
      %v2495 = vpack.c.bf16 %v2403, %v2401
      %v2496 = vpack.c.bf16 %v2406, %v2404
      %v2497 = vpack.c.bf16 %v2407, %v2405
      %v2498 = vpack.c.bf16 %v2410, %v2408
      %v2499 = vpack.c.bf16 %v2411, %v2409
      %v2500 = vpack.c.bf16 %v2414, %v2412
      %v2501 = vpack.c.bf16 %v2415, %v2413
      %v2502 = vpack.c.bf16 %v2418, %v2416
      %v2503 = vpack.c.bf16 %v2419, %v2417
      %v2504 = vpack.c.bf16 %v2422, %v2420
      %v2505 = vpack.c.bf16 %v2423, %v2421
      %v2506 = vpack.c.bf16 %v2426, %v2424
      %v2507 = vpack.c.bf16 %v2427, %v2425
      %v2508 = vpack.c.bf16 %v2430, %v2428
      %v2509 = vpack.c.bf16 %v2431, %v2429
      %v2510 = vpack.c.bf16 %v2434, %v2432
      %v2511 = vpack.c.bf16 %v2435, %v2433
      %v2512 = vpack.c.bf16 %v2438, %v2436
      %v2513 = vpack.c.bf16 %v2439, %v2437
      %v2514 = vpack.c.bf16 %v2442, %v2440
      %v2515 = vpack.c.bf16 %v2443, %v2441
      %v2516 = vpack.c.bf16 %v2446, %v2444
      %v2517 = vpack.c.bf16 %v2447, %v2445
      %v2518 = vpack.c.bf16 %v2450, %v2448
      %v2519 = vpack.c.bf16 %v2451, %v2449
      %v2520 = vpack.c.bf16 %v2454, %v2452
      %v2521 = vpack.c.bf16 %v2455, %v2453
      %v2522 = vpack.c.bf16 %v2458, %v2456
      %v2523 = vpack.c.bf16 %v2459, %v2457
      %v2524 = vld [vmem:[%s3] sm:$0xf]
      %v2525 = vld [vmem:[%s3 + $0x4] sm:$0xf]
      %v2526 = vld [vmem:[%s3 + $0x8] sm:$0xf]
      %v2527 = vld [vmem:[%s3 + $0xc] sm:$0xf]
      %v2528 = vld [vmem:[%s3 + $0x10] sm:$0xf]
      %v2529 = vld [vmem:[%s3 + $0x14] sm:$0xf]
      %v2530 = vld [vmem:[%s3 + $0x18] sm:$0xf]
      %v2531 = vld [vmem:[%s3 + $0x1c] sm:$0xf]
      %v2532 = vld [vmem:[%s3 + $0x20] sm:$0xf]
      %v2533 = vld [vmem:[%s3 + $0x24] sm:$0xf]
      %v2534 = vld [vmem:[%s3 + $0x28] sm:$0xf]
      %v2535 = vld [vmem:[%s3 + $0x2c] sm:$0xf]
      %v2536 = vld [vmem:[%s3 + $0x30] sm:$0xf]
      %v2537 = vld [vmem:[%s3 + $0x34] sm:$0xf]
      %v2538 = vld [vmem:[%s3 + $0x38] sm:$0xf]
      %v2539 = vld [vmem:[%s3 + $0x3c] sm:$0xf]
      %v2540 = vld [vmem:[%s3 + $0x40] sm:$0xf]
      %v2541 = vld [vmem:[%s3 + $0x44] sm:$0xf]
      %v2542 = vld [vmem:[%s3 + $0x48] sm:$0xf]
      %v2543 = vld [vmem:[%s3 + $0x4c] sm:$0xf]
      %v2544 = vld [vmem:[%s3 + $0x50] sm:$0xf]
      %v2545 = vld [vmem:[%s3 + $0x54] sm:$0xf]
      %v2546 = vld [vmem:[%s3 + $0x58] sm:$0xf]
      %v2547 = vld [vmem:[%s3 + $0x5c] sm:$0xf]
      %v2548 = vld [vmem:[%s4] sm:$0x1]
      %v2550 = vlaneseq
      %v2551 = vshrl.u32 %v2550, 7
      %v2552 = vsub.s32 0, %v2551
      %v2553 = vrot.slane %v2548, %v2552
      %v2579 = vunpack.c.l.b16 %v2524
      %v2580 = vunpack.c.l.b16 %v2525
      %v2581 = vunpack.c.l.b16 %v2526
      %v2582 = vunpack.c.l.b16 %v2527
      %v2583 = vunpack.c.l.b16 %v2528
      %v2584 = vunpack.c.l.b16 %v2529
      %v2585 = vunpack.c.l.b16 %v2530
      %v2586 = vunpack.c.l.b16 %v2531
      %v2587 = vunpack.c.l.b16 %v2532
      %v2588 = vunpack.c.l.b16 %v2533
      %v2589 = vunpack.c.l.b16 %v2534
      %v2590 = vunpack.c.l.b16 %v2535
      %v2591 = vunpack.c.l.b16 %v2536
      %v2592 = vunpack.c.l.b16 %v2537
      %v2593 = vunpack.c.l.b16 %v2538
      %v2594 = vunpack.c.l.b16 %v2539
      %v2595 = vunpack.c.l.b16 %v2540
      %v2596 = vunpack.c.l.b16 %v2541
      %v2597 = vunpack.c.l.b16 %v2542
      %v2598 = vunpack.c.l.b16 %v2543
      %v2599 = vunpack.c.l.b16 %v2544
      %v2600 = vunpack.c.l.b16 %v2545
      %v2601 = vunpack.c.l.b16 %v2546
      %v2602 = vunpack.c.l.b16 %v2547
      %v2603 = vpack.c.b16 %v2580, %v2579
      %v2604 = vpack.c.b16 %v2582, %v2581
      %v2605 = vpack.c.b16 %v2584, %v2583
      %v2606 = vpack.c.b16 %v2586, %v2585
      %v2607 = vpack.c.b16 %v2588, %v2587
      %v2608 = vpack.c.b16 %v2590, %v2589
      %v2609 = vpack.c.b16 %v2592, %v2591
      %v2610 = vpack.c.b16 %v2594, %v2593
      %v2611 = vpack.c.b16 %v2596, %v2595
      %v2612 = vpack.c.b16 %v2598, %v2597
      %v2613 = vpack.c.b16 %v2600, %v2599
      %v2614 = vpack.c.b16 %v2602, %v2601
      %vm2627 = vcmask 523264
      %v2629 = vsel %vm2627, %v2461, 0
      %v2632 = vsel %vm2627, %v2463, 0
      %v2635 = vsel %vm2627, %v2465, 0
      %v2638 = vsel %vm2627, %v2467, 0
      %v2641 = vsel %vm2627, %v2469, 0
      %v2644 = vsel %vm2627, %v2471, 0
      %v2647 = vsel %vm2627, %v2473, 0
      %v2650 = vsel %vm2627, %v2475, 0
      %v2653 = vsel %vm2627, %v2477, 0
      %v2656 = vsel %vm2627, %v2479, 0
      %v2659 = vsel %vm2627, %v2481, 0
      %v2662 = vsel %vm2627, %v2483, 0
      %v2665 = vsel %vm2627, %v2485, 0
      %v2668 = vsel %vm2627, %v2487, 0
      %v2671 = vsel %vm2627, %v2489, 0
      %v2674 = vsel %vm2627, %v2491, 0
      %v2677 = vsel %vm2627, %v2493, 0
      %v2680 = vsel %vm2627, %v2495, 0
      %v2683 = vsel %vm2627, %v2497, 0
      %v2686 = vsel %vm2627, %v2499, 0
      %v2689 = vsel %vm2627, %v2501, 0
      %v2692 = vsel %vm2627, %v2503, 0
      %v2695 = vsel %vm2627, %v2505, 0
      %v2698 = vsel %vm2627, %v2507, 0
      %v2701 = vsel %vm2627, %v2509, 0
      %v2704 = vsel %vm2627, %v2511, 0
      %v2707 = vsel %vm2627, %v2513, 0
      %v2710 = vsel %vm2627, %v2515, 0
      %v2713 = vsel %vm2627, %v2517, 0
      %v2716 = vsel %vm2627, %v2519, 0
      %v2719 = vsel %vm2627, %v2521, 0
      %v2722 = vsel %vm2627, %v2523, 0
      %2724 = vmatprep.subr.bf16.mxu0 0
      %2725 = vmatpush1.bf16.msra.mxu0 %v2603
      %2726 = vmatprep.subr.bf16.mxu0 0
      %2727 = vmatpush1.bf16.msra.mxu0 %v2604
      %2728 = vmatprep.subr.bf16.mxu0 0
      %2729 = vmatpush1.bf16.msra.mxu0 %v2605
      %2730 = vmatprep.subr.bf16.mxu0 0
      %2731 = vmatpush1.bf16.msra.mxu0 %v2606
      %2732 = vmatprep.subr.bf16.mxu0 0
      %2733 = vmatpush1.bf16.msra.mxu0 %v2607
      %2734 = vmatprep.subr.bf16.mxu0 0
      %2735 = vmatpush1.bf16.msra.mxu0 %v2608
      %2736 = vmatprep.subr.bf16.mxu0 0
      %2737 = vmatpush1.bf16.msra.mxu0 %v2609
      %2738 = vmatprep.subr.bf16.mxu0 0
      %2739 = vmatpush1.bf16.msra.mxu0 %v2610
      %2740 = vmatprep.subr.bf16.mxu0 0
      %2741 = vmatpush1.bf16.msra.mxu0 %v2611
      %2742 = vmatprep.subr.bf16.mxu0 0
      %2743 = vmatpush1.bf16.msra.mxu0 %v2612
      %2744 = vmatprep.subr.bf16.mxu0 0
      %2745 = vmatpush1.bf16.msra.mxu0 %v2613
      %2746 = vmatprep.subr.bf16.mxu0 0
      %2747 = vmatpush1.bf16.msra.mxu0 %v2614
      %2748 = vmatprep.subr.bf16.mxu0 0
      %2749 = vmatpush1.bf16.msra.mxu0 0
      %2750 = vmatprep.subr.bf16.mxu0 0
      %2751 = vmatpush1.bf16.msra.mxu0 0
      %2752 = vmatprep.subr.bf16.mxu0 0
      %2753 = vmatpush1.bf16.msra.mxu0 0
      %2754 = vmatprep.subr.bf16.mxu0 0
      %2755 = vmatpush1.bf16.msra.mxu0 0
      %2756 = vmatprep.mubr.bf16.mxu0 %v2629
      %2757 = vmatmul.mubr.bf16.gmra.mrb[0].mxu0 %v2460
      %v2758 = vpop.f32.mrb[0].mxu0
      %v2759 = vadd.f32 %v2553, %v2758
      %v2760 = vpop.f32.mrb[0].mxu0
      %v2761 = vpop.f32.mrb[0].mxu0
      %v2762 = vadd.f32 %v2553, %v2761
      %v2763 = vpop.f32.mrb[0].mxu0
      %2764 = vmatprep.mubr.bf16.mxu0 %v2632
      %2765 = vmatmul.mubr.bf16.gmra.mrb[0].mxu0 %v2462
      %v2766 = vpop.f32.mrb[0].mxu0
      %v2767 = vadd.f32 %v2553, %v2766
      %v2768 = vpop.f32.mrb[0].mxu0
      %v2769 = vpop.f32.mrb[0].mxu0
      %v2770 = vadd.f32 %v2553, %v2769
      %v2771 = vpop.f32.mrb[0].mxu0
      %2772 = vmatprep.mubr.bf16.mxu0 %v2635
      %2773 = vmatmul.mubr.bf16.gmra.mrb[0].mxu0 %v2464
      %v2774 = vpop.f32.mrb[0].mxu0
      %v2775 = vadd.f32 %v2553, %v2774
      %v2776 = vpop.f32.mrb[0].mxu0
      %v2777 = vpop.f32.mrb[0].mxu0
      %v2778 = vadd.f32 %v2553, %v2777
      %v2779 = vpop.f32.mrb[0].mxu0
      %2780 = vmatprep.mubr.bf16.mxu0 %v2638
      %2781 = vmatmul.mubr.bf16.gmra.mrb[0].mxu0 %v2466
      %v2782 = vpop.f32.mrb[0].mxu0
      %v2783 = vadd.f32 %v2553, %v2782
      %v2784 = vpop.f32.mrb[0].mxu0
      %v2785 = vpop.f32.mrb[0].mxu0
      %v2786 = vadd.f32 %v2553, %v2785
      %v2787 = vpop.f32.mrb[0].mxu0
      %2788 = vmatprep.mubr.bf16.mxu0 %v2641
      %2789 = vmatmul.mubr.bf16.gmra.mrb[0].mxu0 %v2468
      %v2790 = vpop.f32.mrb[0].mxu0
      %v2791 = vadd.f32 %v2553, %v2790
      %v2792 = vpop.f32.mrb[0].mxu0
      %v2793 = vpop.f32.mrb[0].mxu0
      %v2794 = vadd.f32 %v2553, %v2793
      %v2795 = vpop.f32.mrb[0].mxu0
      %2796 = vmatprep.mubr.bf16.mxu0 %v2644
      %2797 = vmatmul.mubr.bf16.gmra.mrb[0].mxu0 %v2470
      %v2798 = vpop.f32.mrb[0].mxu0
      %v2799 = vadd.f32 %v2553, %v2798
      %v2800 = vpop.f32.mrb[0].mxu0
      %v2801 = vpop.f32.mrb[0].mxu0
      %v2802 = vadd.f32 %v2553, %v2801
      %v2803 = vpop.f32.mrb[0].mxu0
      %2804 = vmatprep.mubr.bf16.mxu0 %v2647
      %2805 = vmatmul.mubr.bf16.gmra.mrb[0].mxu0 %v2472
      %v2806 = vpop.f32.mrb[0].mxu0
      %v2807 = vadd.f32 %v2553, %v2806
      %v2808 = vpop.f32.mrb[0].mxu0
      %v2809 = vpop.f32.mrb[0].mxu0
      %v2810 = vadd.f32 %v2553, %v2809
      %v2811 = vpop.f32.mrb[0].mxu0
      %2812 = vmatprep.mubr.bf16.mxu0 %v2650
      %2813 = vmatmul.mubr.bf16.gmra.mrb[0].mxu0 %v2474
      %v2814 = vpop.f32.mrb[0].mxu0
      %v2815 = vadd.f32 %v2553, %v2814
      %v2816 = vpop.f32.mrb[0].mxu0
      %v2817 = vpop.f32.mrb[0].mxu0
      %v2818 = vadd.f32 %v2553, %v2817
      %v2819 = vpop.f32.mrb[0].mxu0
      %2820 = vmatprep.mubr.bf16.mxu0 %v2653
      %2821 = vmatmul.mubr.bf16.gmra.mrb[0].mxu0 %v2476
      %v2822 = vpop.f32.mrb[0].mxu0
      %v2823 = vadd.f32 %v2553, %v2822
      %v2824 = vpop.f32.mrb[0].mxu0
      %v2825 = vpop.f32.mrb[0].mxu0
      %v2826 = vadd.f32 %v2553, %v2825
      %v2827 = vpop.f32.mrb[0].mxu0
      %2828 = vmatprep.mubr.bf16.mxu0 %v2656
      %2829 = vmatmul.mubr.bf16.gmra.mrb[0].mxu0 %v2478
      %v2830 = vpop.f32.mrb[0].mxu0
      %v2831 = vadd.f32 %v2553, %v2830
      %v2832 = vpop.f32.mrb[0].mxu0
      %v2833 = vpop.f32.mrb[0].mxu0
      %v2834 = vadd.f32 %v2553, %v2833
      %v2835 = vpop.f32.mrb[0].mxu0
      %2836 = vmatprep.mubr.bf16.mxu0 %v2659
      %2837 = vmatmul.mubr.bf16.gmra.mrb[0].mxu0 %v2480
      %v2838 = vpop.f32.mrb[0].mxu0
      %v2839 = vadd.f32 %v2553, %v2838
      %v2840 = vpop.f32.mrb[0].mxu0
      %v2841 = vpop.f32.mrb[0].mxu0
      %v2842 = vadd.f32 %v2553, %v2841
      %v2843 = vpop.f32.mrb[0].mxu0
      %2844 = vmatprep.mubr.bf16.mxu0 %v2662
      %2845 = vmatmul.mubr.bf16.gmra.mrb[0].mxu0 %v2482
      %v2846 = vpop.f32.mrb[0].mxu0
      %v2847 = vadd.f32 %v2553, %v2846
      %v2848 = vpop.f32.mrb[0].mxu0
      %v2849 = vpop.f32.mrb[0].mxu0
      %v2850 = vadd.f32 %v2553, %v2849
      %v2851 = vpop.f32.mrb[0].mxu0
      %2852 = vmatprep.mubr.bf16.mxu0 %v2665
      %2853 = vmatmul.mubr.bf16.gmra.mrb[0].mxu0 %v2484
      %v2854 = vpop.f32.mrb[0].mxu0
      %v2855 = vadd.f32 %v2553, %v2854
      %v2856 = vpop.f32.mrb[0].mxu0
      %v2857 = vpop.f32.mrb[0].mxu0
      %v2858 = vadd.f32 %v2553, %v2857
      %v2859 = vpop.f32.mrb[0].mxu0
      %2860 = vmatprep.mubr.bf16.mxu0 %v2668
      %2861 = vmatmul.mubr.bf16.gmra.mrb[0].mxu0 %v2486
      %v2862 = vpop.f32.mrb[0].mxu0
      %v2863 = vadd.f32 %v2553, %v2862
      %v2864 = vpop.f32.mrb[0].mxu0
      %v2865 = vpop.f32.mrb[0].mxu0
      %v2866 = vadd.f32 %v2553, %v2865
      %v2867 = vpop.f32.mrb[0].mxu0
      %2868 = vmatprep.mubr.bf16.mxu0 %v2671
      %2869 = vmatmul.mubr.bf16.gmra.mrb[0].mxu0 %v2488
      %v2870 = vpop.f32.mrb[0].mxu0
      %v2871 = vadd.f32 %v2553, %v2870
      %v2872 = vpop.f32.mrb[0].mxu0
      %v2873 = vpop.f32.mrb[0].mxu0
      %v2874 = vadd.f32 %v2553, %v2873
      %v2875 = vpop.f32.mrb[0].mxu0
      %2876 = vmatprep.mubr.bf16.mxu0 %v2674
      %2877 = vmatmul.mubr.bf16.gmra.mrb[0].mxu0 %v2490
      %v2878 = vpop.f32.mrb[0].mxu0
      %v2879 = vadd.f32 %v2553, %v2878
      %v2880 = vpop.f32.mrb[0].mxu0
      %v2881 = vpop.f32.mrb[0].mxu0
      %v2882 = vadd.f32 %v2553, %v2881
      %v2883 = vpop.f32.mrb[0].mxu0
      %2884 = vmatprep.mubr.bf16.mxu0 %v2677
      %2885 = vmatmul.mubr.bf16.gmra.mrb[0].mxu0 %v2492
      %v2886 = vpop.f32.mrb[0].mxu0
      %v2887 = vadd.f32 %v2553, %v2886
      %v2888 = vpop.f32.mrb[0].mxu0
      %v2889 = vpop.f32.mrb[0].mxu0
      %v2890 = vadd.f32 %v2553, %v2889
      %v2891 = vpop.f32.mrb[0].mxu0
      %2892 = vmatprep.mubr.bf16.mxu0 %v2680
      %2893 = vmatmul.mubr.bf16.gmra.mrb[0].mxu0 %v2494
      %v2894 = vpop.f32.mrb[0].mxu0
      %v2895 = vadd.f32 %v2553, %v2894
      %v2896 = vpop.f32.mrb[0].mxu0
      %v2897 = vpop.f32.mrb[0].mxu0
      %v2898 = vadd.f32 %v2553, %v2897
      %v2899 = vpop.f32.mrb[0].mxu0
      %2900 = vmatprep.mubr.bf16.mxu0 %v2683
      %2901 = vmatmul.mubr.bf16.gmra.mrb[0].mxu0 %v2496
      %v2902 = vpop.f32.mrb[0].mxu0
      %v2903 = vadd.f32 %v2553, %v2902
      %v2904 = vpop.f32.mrb[0].mxu0
      %v2905 = vpop.f32.mrb[0].mxu0
      %v2906 = vadd.f32 %v2553, %v2905
      %v2907 = vpop.f32.mrb[0].mxu0
      %2908 = vmatprep.mubr.bf16.mxu0 %v2686
      %2909 = vmatmul.mubr.bf16.gmra.mrb[0].mxu0 %v2498
      %v2910 = vpop.f32.mrb[0].mxu0
      %v2911 = vadd.f32 %v2553, %v2910
      %v2912 = vpop.f32.mrb[0].mxu0
      %v2913 = vpop.f32.mrb[0].mxu0
      %v2914 = vadd.f32 %v2553, %v2913
      %v2915 = vpop.f32.mrb[0].mxu0
      %2916 = vmatprep.mubr.bf16.mxu0 %v2689
      %2917 = vmatmul.mubr.bf16.gmra.mrb[0].mxu0 %v2500
      %v2918 = vpop.f32.mrb[0].mxu0
      %v2919 = vadd.f32 %v2553, %v2918
      %v2920 = vpop.f32.mrb[0].mxu0
      %v2921 = vpop.f32.mrb[0].mxu0
      %v2922 = vadd.f32 %v2553, %v2921
      %v2923 = vpop.f32.mrb[0].mxu0
      %2924 = vmatprep.mubr.bf16.mxu0 %v2692
      %2925 = vmatmul.mubr.bf16.gmra.mrb[0].mxu0 %v2502
      %v2926 = vpop.f32.mrb[0].mxu0
      %v2927 = vadd.f32 %v2553, %v2926
      %v2928 = vpop.f32.mrb[0].mxu0
      %v2929 = vpop.f32.mrb[0].mxu0
      %v2930 = vadd.f32 %v2553, %v2929
      %v2931 = vpop.f32.mrb[0].mxu0
      %2932 = vmatprep.mubr.bf16.mxu0 %v2695
      %2933 = vmatmul.mubr.bf16.gmra.mrb[0].mxu0 %v2504
      %v2934 = vpop.f32.mrb[0].mxu0
      %v2935 = vadd.f32 %v2553, %v2934
      %v2936 = vpop.f32.mrb[0].mxu0
      %v2937 = vpop.f32.mrb[0].mxu0
      %v2938 = vadd.f32 %v2553, %v2937
      %v2939 = vpop.f32.mrb[0].mxu0
      %2940 = vmatprep.mubr.bf16.mxu0 %v2698
      %2941 = vmatmul.mubr.bf16.gmra.mrb[0].mxu0 %v2506
      %v2942 = vpop.f32.mrb[0].mxu0
      %v2943 = vadd.f32 %v2553, %v2942
      %v2944 = vpop.f32.mrb[0].mxu0
      %v2945 = vpop.f32.mrb[0].mxu0
      %v2946 = vadd.f32 %v2553, %v2945
      %v2947 = vpop.f32.mrb[0].mxu0
      %2948 = vmatprep.mubr.bf16.mxu0 %v2701
      %2949 = vmatmul.mubr.bf16.gmra.mrb[0].mxu0 %v2508
      %v2950 = vpop.f32.mrb[0].mxu0
      %v2951 = vadd.f32 %v2553, %v2950
      %v2952 = vpop.f32.mrb[0].mxu0
      %v2953 = vpop.f32.mrb[0].mxu0
      %v2954 = vadd.f32 %v2553, %v2953
      %v2955 = vpop.f32.mrb[0].mxu0
      %2956 = vmatprep.mubr.bf16.mxu0 %v2704
      %2957 = vmatmul.mubr.bf16.gmra.mrb[0].mxu0 %v2510
      %v2958 = vpop.f32.mrb[0].mxu0
      %v2959 = vadd.f32 %v2553, %v2958
      %v2960 = vpop.f32.mrb[0].mxu0
      %v2961 = vpop.f32.mrb[0].mxu0
      %v2962 = vadd.f32 %v2553, %v2961
      %v2963 = vpop.f32.mrb[0].mxu0
      %2964 = vmatprep.mubr.bf16.mxu0 %v2707
      %2965 = vmatmul.mubr.bf16.gmra.mrb[0].mxu0 %v2512
      %v2966 = vpop.f32.mrb[0].mxu0
      %v2967 = vadd.f32 %v2553, %v2966
      %v2968 = vpop.f32.mrb[0].mxu0
      %v2969 = vpop.f32.mrb[0].mxu0
      %v2970 = vadd.f32 %v2553, %v2969
      %v2971 = vpop.f32.mrb[0].mxu0
      %2972 = vmatprep.mubr.bf16.mxu0 %v2710
      %2973 = vmatmul.mubr.bf16.gmra.mrb[0].mxu0 %v2514
      %v2974 = vpop.f32.mrb[0].mxu0
      %v2975 = vadd.f32 %v2553, %v2974
      %v2976 = vpop.f32.mrb[0].mxu0
      %v2977 = vpop.f32.mrb[0].mxu0
      %v2978 = vadd.f32 %v2553, %v2977
      %v2979 = vpop.f32.mrb[0].mxu0
      %2980 = vmatprep.mubr.bf16.mxu0 %v2713
      %2981 = vmatmul.mubr.bf16.gmra.mrb[0].mxu0 %v2516
      %v2982 = vpop.f32.mrb[0].mxu0
      %v2983 = vadd.f32 %v2553, %v2982
      %v2984 = vpop.f32.mrb[0].mxu0
      %v2985 = vpop.f32.mrb[0].mxu0
      %v2986 = vadd.f32 %v2553, %v2985
      %v2987 = vpop.f32.mrb[0].mxu0
      %2988 = vmatprep.mubr.bf16.mxu0 %v2716
      %2989 = vmatmul.mubr.bf16.gmra.mrb[0].mxu0 %v2518
      %v2990 = vpop.f32.mrb[0].mxu0
      %v2991 = vadd.f32 %v2553, %v2990
      %v2992 = vpop.f32.mrb[0].mxu0
      %v2993 = vpop.f32.mrb[0].mxu0
      %v2994 = vadd.f32 %v2553, %v2993
      %v2995 = vpop.f32.mrb[0].mxu0
      %2996 = vmatprep.mubr.bf16.mxu0 %v2719
      %2997 = vmatmul.mubr.bf16.gmra.mrb[0].mxu0 %v2520
      %v2998 = vpop.f32.mrb[0].mxu0
      %v2999 = vadd.f32 %v2553, %v2998
      %v3000 = vpop.f32.mrb[0].mxu0
      %v3001 = vpop.f32.mrb[0].mxu0
      %v3002 = vadd.f32 %v2553, %v3001
      %v3003 = vpop.f32.mrb[0].mxu0
      %3004 = vmatprep.mubr.bf16.mxu0 %v2722
      %3005 = vmatmul.mubr.bf16.gmra.mrb[0].mxu0 %v2522
      %v3006 = vpop.f32.mrb[0].mxu0
      %v3007 = vadd.f32 %v2553, %v3006
      %v3008 = vpop.f32.mrb[0].mxu0
      %v3009 = vpop.f32.mrb[0].mxu0
      %v3010 = vadd.f32 %v2553, %v3009
      %v3011 = vpop.f32.mrb[0].mxu0
      %3012 = vdwg.mxu0
      %v3013 = vadd.f32 %v2759, %v229
      %v3014 = vadd.f32 %v2762, %v230
      %v3015 = vadd.f32 %v2767, %v231
      %v3016 = vadd.f32 %v2770, %v232
      %v3017 = vadd.f32 %v2775, %v233
      %v3018 = vadd.f32 %v2778, %v234
      %v3019 = vadd.f32 %v2783, %v235
      %v3020 = vadd.f32 %v2786, %v236
      %v3021 = vadd.f32 %v2791, %v237
      %v3022 = vadd.f32 %v2794, %v238
      %v3023 = vadd.f32 %v2799, %v239
      %v3024 = vadd.f32 %v2802, %v240
      %v3025 = vadd.f32 %v2807, %v241
      %v3026 = vadd.f32 %v2810, %v242
      %v3027 = vadd.f32 %v2815, %v243
      %v3028 = vadd.f32 %v2818, %v244
      %v3029 = vadd.f32 %v2823, %v245
      %v3030 = vadd.f32 %v2826, %v246
      %v3031 = vadd.f32 %v2831, %v247
      %v3032 = vadd.f32 %v2834, %v248
      %v3033 = vadd.f32 %v2839, %v249
      %v3034 = vadd.f32 %v2842, %v250
      %v3035 = vadd.f32 %v2847, %v251
      %v3036 = vadd.f32 %v2850, %v252
      %v3037 = vadd.f32 %v2855, %v253
      %v3038 = vadd.f32 %v2858, %v254
      %v3039 = vadd.f32 %v2863, %v255
      %v3040 = vadd.f32 %v2866, %v256
      %v3041 = vadd.f32 %v2871, %v257
      %v3042 = vadd.f32 %v2874, %v258
      %v3043 = vadd.f32 %v2879, %v259
      %v3044 = vadd.f32 %v2882, %v260
      %v3045 = vadd.f32 %v2887, %v261
      %v3046 = vadd.f32 %v2890, %v262
      %v3047 = vadd.f32 %v2895, %v263
      %v3048 = vadd.f32 %v2898, %v264
      %v3049 = vadd.f32 %v2903, %v265
      %v3050 = vadd.f32 %v2906, %v266
      %v3051 = vadd.f32 %v2911, %v267
      %v3052 = vadd.f32 %v2914, %v268
      %v3053 = vadd.f32 %v2919, %v269
      %v3054 = vadd.f32 %v2922, %v270
      %v3055 = vadd.f32 %v2927, %v271
      %v3056 = vadd.f32 %v2930, %v272
      %v3057 = vadd.f32 %v2935, %v273
      %v3058 = vadd.f32 %v2938, %v274
      %v3059 = vadd.f32 %v2943, %v275
      %v3060 = vadd.f32 %v2946, %v276
      %v3061 = vadd.f32 %v2951, %v277
      %v3062 = vadd.f32 %v2954, %v278
      %v3063 = vadd.f32 %v2959, %v279
      %v3064 = vadd.f32 %v2962, %v280
      %v3065 = vadd.f32 %v2967, %v281
      %v3066 = vadd.f32 %v2970, %v282
      %v3067 = vadd.f32 %v2975, %v283
      %v3068 = vadd.f32 %v2978, %v284
      %v3069 = vadd.f32 %v2983, %v285
      %v3070 = vadd.f32 %v2986, %v286
      %v3071 = vadd.f32 %v2991, %v287
      %v3072 = vadd.f32 %v2994, %v288
      %v3073 = vadd.f32 %v2999, %v289
      %v3074 = vadd.f32 %v3002, %v290
      %v3075 = vadd.f32 %v3007, %v291
      %v3076 = vadd.f32 %v3010, %v292
      %3077 = vst.msk [vmem:[%s226] sm:$0xff] %vm293, %v3013
      %3078 = vst.msk [vmem:[%s226 + $0x8] sm:$0xff] %vm293, %v3014
      %3079 = vst.msk [vmem:[%s226 + $0x10] sm:$0xff] %vm293, %v3015
      %3080 = vst.msk [vmem:[%s226 + $0x18] sm:$0xff] %vm293, %v3016
      %3081 = vst.msk [vmem:[%s226 + $0x20] sm:$0xff] %vm293, %v3017
      %3082 = vst.msk [vmem:[%s226 + $0x28] sm:$0xff] %vm293, %v3018
      %3083 = vst.msk [vmem:[%s226 + $0x30] sm:$0xff] %vm293, %v3019
      %3084 = vst.msk [vmem:[%s226 + $0x38] sm:$0xff] %vm293, %v3020
      %3085 = vst.msk [vmem:[%s226 + $0x40] sm:$0xff] %vm293, %v3021
      %3086 = vst.msk [vmem:[%s226 + $0x48] sm:$0xff] %vm293, %v3022
      %3087 = vst.msk [vmem:[%s226 + $0x50] sm:$0xff] %vm293, %v3023
      %3088 = vst.msk [vmem:[%s226 + $0x58] sm:$0xff] %vm293, %v3024
      %3089 = vst.msk [vmem:[%s226 + $0x60] sm:$0xff] %vm293, %v3025
      %3090 = vst.msk [vmem:[%s226 + $0x68] sm:$0xff] %vm293, %v3026
      %3091 = vst.msk [vmem:[%s226 + $0x70] sm:$0xff] %vm293, %v3027
      %3092 = vst.msk [vmem:[%s226 + $0x78] sm:$0xff] %vm293, %v3028
      %3093 = vst.msk [vmem:[%s226 + $0x80] sm:$0xff] %vm293, %v3029
      %3094 = vst.msk [vmem:[%s226 + $0x88] sm:$0xff] %vm293, %v3030
      %3095 = vst.msk [vmem:[%s226 + $0x90] sm:$0xff] %vm293, %v3031
      %3096 = vst.msk [vmem:[%s226 + $0x98] sm:$0xff] %vm293, %v3032
      %3097 = vst.msk [vmem:[%s226 + $0xa0] sm:$0xff] %vm293, %v3033
      %3098 = vst.msk [vmem:[%s226 + $0xa8] sm:$0xff] %vm293, %v3034
      %3099 = vst.msk [vmem:[%s226 + $0xb0] sm:$0xff] %vm293, %v3035
      %3100 = vst.msk [vmem:[%s226 + $0xb8] sm:$0xff] %vm293, %v3036
      %3101 = vst.msk [vmem:[%s226 + $0xc0] sm:$0xff] %vm293, %v3037
      %3102 = vst.msk [vmem:[%s226 + $0xc8] sm:$0xff] %vm293, %v3038
      %3103 = vst.msk [vmem:[%s226 + $0xd0] sm:$0xff] %vm293, %v3039
      %3104 = vst.msk [vmem:[%s226 + $0xd8] sm:$0xff] %vm293, %v3040
      %3105 = vst.msk [vmem:[%s226 + $0xe0] sm:$0xff] %vm293, %v3041
      %3106 = vst.msk [vmem:[%s226 + $0xe8] sm:$0xff] %vm293, %v3042
      %3107 = vst.msk [vmem:[%s226 + $0xf0] sm:$0xff] %vm293, %v3043
      %3108 = vst.msk [vmem:[%s226 + $0xf8] sm:$0xff] %vm293, %v3044
      %3109 = vst.msk [vmem:[%s226 + $0x100] sm:$0xff] %vm293, %v3045
      %3110 = vst.msk [vmem:[%s226 + $0x108] sm:$0xff] %vm293, %v3046
      %3111 = vst.msk [vmem:[%s226 + $0x110] sm:$0xff] %vm293, %v3047
      %3112 = vst.msk [vmem:[%s226 + $0x118] sm:$0xff] %vm293, %v3048
      %3113 = vst.msk [vmem:[%s226 + $0x120] sm:$0xff] %vm293, %v3049
      %3114 = vst.msk [vmem:[%s226 + $0x128] sm:$0xff] %vm293, %v3050
      %3115 = vst.msk [vmem:[%s226 + $0x130] sm:$0xff] %vm293, %v3051
      %3116 = vst.msk [vmem:[%s226 + $0x138] sm:$0xff] %vm293, %v3052
      %3117 = vst.msk [vmem:[%s226 + $0x140] sm:$0xff] %vm293, %v3053
      %3118 = vst.msk [vmem:[%s226 + $0x148] sm:$0xff] %vm293, %v3054
      %3119 = vst.msk [vmem:[%s226 + $0x150] sm:$0xff] %vm293, %v3055
      %3120 = vst.msk [vmem:[%s226 + $0x158] sm:$0xff] %vm293, %v3056
      %3121 = vst.msk [vmem:[%s226 + $0x160] sm:$0xff] %vm293, %v3057
      %3122 = vst.msk [vmem:[%s226 + $0x168] sm:$0xff] %vm293, %v3058
      %3123 = vst.msk [vmem:[%s226 + $0x170] sm:$0xff] %vm293, %v3059
      %3124 = vst.msk [vmem:[%s226 + $0x178] sm:$0xff] %vm293, %v3060
      %3125 = vst.msk [vmem:[%s226 + $0x180] sm:$0xff] %vm293, %v3061
      %3126 = vst.msk [vmem:[%s226 + $0x188] sm:$0xff] %vm293, %v3062
      %3127 = vst.msk [vmem:[%s226 + $0x190] sm:$0xff] %vm293, %v3063
      %3128 = vst.msk [vmem:[%s226 + $0x198] sm:$0xff] %vm293, %v3064
      %3129 = vst.msk [vmem:[%s226 + $0x1a0] sm:$0xff] %vm293, %v3065
      %3130 = vst.msk [vmem:[%s226 + $0x1a8] sm:$0xff] %vm293, %v3066
      %3131 = vst.msk [vmem:[%s226 + $0x1b0] sm:$0xff] %vm293, %v3067
      %3132 = vst.msk [vmem:[%s226 + $0x1b8] sm:$0xff] %vm293, %v3068
      %3133 = vst.msk [vmem:[%s226 + $0x1c0] sm:$0xff] %vm293, %v3069
      %3134 = vst.msk [vmem:[%s226 + $0x1c8] sm:$0xff] %vm293, %v3070
      %3135 = vst.msk [vmem:[%s226 + $0x1d0] sm:$0xff] %vm293, %v3071
      %3136 = vst.msk [vmem:[%s226 + $0x1d8] sm:$0xff] %vm293, %v3072
      %3137 = vst.msk [vmem:[%s226 + $0x1e0] sm:$0xff] %vm293, %v3073
      %3138 = vst.msk [vmem:[%s226 + $0x1e8] sm:$0xff] %vm293, %v3074
      %3139 = vst.msk [vmem:[%s226 + $0x1f0] sm:$0xff] %vm293, %v3075
      %3140 = vst.msk [vmem:[%s226 + $0x1f8] sm:$0xff] %vm293, %v3076
      %s3141 = smul.u32 64, %s16
      %p3142 = scmp.lt.s32.totalorder %s3141, 255
      %s3143 = scalar_select %p3142, %s3141, 255
      %s3144 = smul.addr %s3143, 8
      %s3145 = scalar_lea.vmem %s5, %s3144
      // Predicated region
      $region41: #{tpu_custom_call.1} parent=39 // pred_check
        %p3146 = pneg %p144
      $region42: #{tpu_custom_call.1} parent=39 // pred_check_branch
        %3148 = sbr.rel (%p3146) target = $region44
      $region43: #{tpu_custom_call.1} parent=39 // pred_region
        %s3149 = smul.u32 64, %s16
      $region44: #{tpu_custom_call.1} parent=39 // pred_fallthru
        _
    $region40: #{tpu_custom_call.1} parent=5 // pred_fallthru
      _
    %p3150 = scmp.le.s32.totalorder 2, %s11
    // Predicated region
    $region45: #{tpu_custom_call.1} parent=5 // pred_check
      %p3151 = pneg %p3150
    $region46: #{tpu_custom_call.1} parent=5 // pred_check_branch
      %3153 = sbr.rel (%p3151) target = $region48
    $region47: #{tpu_custom_call.1} parent=5 // pred_region
      %s3154 = ssub.s32 %s11, 2
      // Predicated region
      $region49: #{tpu_custom_call.1} parent=47 // pred_check
        %p3155 = pneg %p150
      $region50: #{tpu_custom_call.1} parent=47 // pred_check_branch
        %3157 = sbr.rel (%p3155) target = $region52
      $region51: #{tpu_custom_call.1} parent=47 // pred_region
        %s3158 = smul.u32 64, %s17
        %p3159 = scmp.lt.s32.totalorder %s3158, 255
        %s3160 = scalar_select %p3159, %s3158, 255
        %s3161 = smul.addr %s3160, 8
        %s3162 = scalar_lea.vmem %s5, %s3161
      $region52: #{tpu_custom_call.1} parent=47 // pred_fallthru
        _
    $region48: #{tpu_custom_call.1} parent=5 // pred_fallthru
      _
  $region6: #{tpu_custom_call.1} parent=0 // loop_footer
    %s15 = sadd.s32 1, %s11
  $region7: #{tpu_custom_call.1} parent=0 // loop_footer_branch
    %10 = sbr.rel target = $region3
  $region8: #{tpu_custom_call.1} parent=0 // loop_exit
    _

</llo_original>
